<compile_context>
chip_gen: v7x
topology: tpu7x:2x2x1
jax: 0.10.0
libtpu: 0.0.40
codegen_flags: <defaults>
</compile_context>

<pallas_src>
import jax
import jax.numpy as jnp
from jax.experimental import pallas as pl
from jax.experimental.pallas import tpu as pltpu


_SLOPE = 0.2      # nn.LeakyReLU(0.2) everywhere in the original module
_BN_EPS = 1e-5


def _leaky(v):
    return jnp.where(v >= 0, v, _SLOPE * v)


# --------------------------------------------------------------------------- #
# The single fused Pallas kernel (one grid step per batch element)
# --------------------------------------------------------------------------- #
def _seg_fused_kernel(
    x1_ref, x2_ref, ut_ref,
    w_sc1t_ref, b_sc1_ref,          # SegModule.conv1 (64 -> mid), BN folded, transposed
    w_gapt_ref, b_gap_ref,          # ASPP conv1 after GAP (128 -> mid), BN folded, transposed
    w_pxt_ref, b_px_ref,            # stacked ASPP c2..c5 center taps (128 -> 4*mid), transposed
    wb_gapt_ref, wb_pxt_ref, b_bott_ref,   # ASPP bottleneck split, transposed
    w2at_ref, w2bt_ref, b2_ref,     # SegModule.conv2 split, transposed
    w3t_ref, b3_ref,                # SegModule.conv3 (mid -> 2), transposed
    seg_ref, seg_feat_ref,
):
    f32 = jnp.float32
    bf16 = jnp.bfloat16

    # ---- SegModule.conv1: 1x1 conv + folded BN + LeakyReLU (channels-first) ----
    x1 = x1_ref[0]                                                   # (C1, P1) bf16
    y1 = _leaky(jnp.dot(w_sc1t_ref[...], x1, preferred_element_type=f32)
                + b_sc1_ref[...])                                    # (mid, P1) f32

    # ---- ASPP on x2 (channels-first) ----
    x2 = x2_ref[0]                                                   # (C2, P2) bf16

    # GAP branch (AdaptiveAvgPool2d -> 1x1 conv -> BN -> LeakyReLU).  Spatially
    # constant, so it enters the bottleneck as a per-batch bias column.
    gap = jnp.mean(x2.astype(f32), axis=1, keepdims=True)            # (C2, 1)
    gap_b = jnp.broadcast_to(gap, x2.shape).astype(bf16)             # (C2, P2)
    f1 = _leaky(jnp.dot(w_gapt_ref[...], gap_b, preferred_element_type=f32)
                + b_gap_ref[...])                                    # (mid, P2), equal cols
    bias1 = jnp.dot(wb_gapt_ref[...], f1.astype(bf16),
                    preferred_element_type=f32)                      # (mid, P2), equal cols

    # c2 (1x1) and c3..c5 (dilated 3x3 collapsed to center tap): one matmul.
    feats = _leaky(jnp.dot(w_pxt_ref[...], x2, preferred_element_type=f32)
                   + b_px_ref[...])                                  # (4*mid, P2)

    # Bottleneck 1x1 conv + BN + LeakyReLU (Dropout2d identity in eval mode).
    a = _leaky(jnp.dot(wb_pxt_ref[...], feats.astype(bf16),
                       preferred_element_type=f32)
               + bias1 + b_bott_ref[...])                            # (mid, P2)

    # ---- reassociated upsample + conv2b:  w2b^T @ (U @ a) == (w2b^T @ a) @ U^T ----
    t = jnp.dot(w2bt_ref[...], a.astype(bf16), preferred_element_type=f32)     # (mid, P2)
    up = jnp.dot(t.astype(bf16), ut_ref[...], preferred_element_type=f32)      # (mid, P1)

    # ---- SegModule.conv2 on concat([y1, upsampled ASPP]) via split weights ----
    seg_feat = _leaky(
        jnp.dot(w2at_ref[...], y1.astype(bf16), preferred_element_type=f32)
        + up + b2_ref[...])                                          # (mid, P1)
    seg_feat_ref[0] = seg_feat.astype(seg_feat_ref.dtype)            # lane-dense store

    # ---- SegModule.conv3: 1x1 conv with bias, no activation ----
    seg = (jnp.dot(w3t_ref[...], seg_feat.astype(bf16), preferred_element_type=f32)
           + b3_ref[...])                                            # (n_cls, P1)
    seg_ref[0] = seg.astype(seg_ref.dtype)                           # lane-dense store


# --------------------------------------------------------------------------- #
# Bilinear interpolation matrix (matches torch F.interpolate semantics)
# --------------------------------------------------------------------------- #
def _bilinear_matrix(out_size, in_size, align_corners=False):
    if align_corners:
        if out_size == 1:
            src = jnp.zeros((out_size,), jnp.float32)
        else:
            src = jnp.arange(out_size, dtype=jnp.float32) * ((in_size - 1) / (out_size - 1))
    else:
        src = (jnp.arange(out_size, dtype=jnp.float32) + 0.5) * (in_size / out_size) - 0.5
        src = jnp.maximum(src, 0.0)
    i0 = jnp.minimum(jnp.floor(src).astype(jnp.int32), in_size - 1)
    i1 = jnp.minimum(i0 + 1, in_size - 1)
    f = src - i0.astype(jnp.float32)
    eye = jnp.eye(in_size, dtype=jnp.float32)
    return (1.0 - f)[:, None] * eye[i0] + f[:, None] * eye[i1]          # (out, in)


# --------------------------------------------------------------------------- #
# Parameter construction (deterministic, synthetic) with BN folded into weights
# --------------------------------------------------------------------------- #
def _make_conv_bn(key, cin, cout, ksize, conv_bias):
    """Conv(+bias) + BatchNorm folded (inference). w: (k*k*cin, cout) scale-folded."""
    k_w, k_b, k_g, k_be, k_m, k_v = jax.random.split(key, 6)
    fan_in = ksize * ksize * cin
    w = jax.random.normal(k_w, (fan_in, cout), jnp.float32) / jnp.sqrt(float(fan_in))
    b = (0.05 * jax.random.normal(k_b, (cout,), jnp.float32)
         if conv_bias else jnp.zeros((cout,), jnp.float32))
    gamma = 1.0 + 0.1 * jax.random.normal(k_g, (cout,), jnp.float32)
    beta = 0.1 * jax.random.normal(k_be, (cout,), jnp.float32)
    mean = 0.1 * jax.random.normal(k_m, (cout,), jnp.float32)
    var = 1.0 + 0.1 * jax.random.uniform(k_v, (cout,), jnp.float32)
    scale = gamma / jnp.sqrt(var + _BN_EPS)
    return {"w": w * scale[None, :], "b": beta + scale * (b - mean)}


def _make_conv_plain(key, cin, cout):
    k_w, k_b = jax.random.split(key, 2)
    w = jax.random.normal(k_w, (cin, cout), jnp.float32) / jnp.sqrt(float(cin))
    b = 0.05 * jax.random.normal(k_b, (cout,), jnp.float32)
    return {"w": w, "b": b}


def make_params(key, in_channel=128, mid_channel=64):
    ks = jax.random.split(key, 9)
    inner = mid_channel        # ASPP inner_features
    return {
        "aspp": {
            "c1": _make_conv_bn(ks[0], in_channel, inner, 1, conv_bias=False),
            "c2": _make_conv_bn(ks[1], in_channel, inner, 1, conv_bias=False),
            "c3": _make_conv_bn(ks[2], in_channel, inner, 3, conv_bias=False),
            "c4": _make_conv_bn(ks[3], in_channel, inner, 3, conv_bias=False),
            "c5": _make_conv_bn(ks[4], in_channel, inner, 3, conv_bias=False),
            "bottleneck": _make_conv_bn(ks[5], inner * 5, mid_channel, 1, conv_bias=False),
        },
        "conv1": _make_conv_bn(ks[6], 64, mid_channel, 1, conv_bias=True),
        "conv2": _make_conv_bn(ks[7], mid_channel * 2, mid_channel, 1, conv_bias=True),
        "conv3": _make_conv_plain(ks[8], mid_channel, 2),
    }


# --------------------------------------------------------------------------- #
# Forward pass
# --------------------------------------------------------------------------- #
def seg_module_forward(x1_nchw, x2_nchw, params, dilations=(12, 24, 36)):
    """Inputs NCHW (PyTorch convention); outputs (seg, seg_feat) in NCHW."""
    N, C1, H, W = x1_nchw.shape
    _, C2, H2, W2 = x2_nchw.shape
    mid = params["conv1"]["w"].shape[1]
    n_cls = params["conv3"]["w"].shape[1]
    P1, P2 = H * W, H2 * W2
    bf16, f32 = jnp.bfloat16, jnp.float32

    if min(dilations) < max(H2, W2):
        # TODO(synk): general dilated-3x3 path (shifted-window K-reduction) only
        # needed when a dilation is smaller than the ASPP spatial size.
        raise NotImplementedError("center-tap collapse requires dilation >= spatial size")

    # ---- restructure folded parameters for the fused channels-first kernel ----
    asp = params["aspp"]

    def _center(w3x3):  # (9*C2, cout) -> center tap rows (C2, cout); tap index 4 = (ky=1,kx=1)
        return w3x3[4 * C2:5 * C2, :]

    w_px = jnp.concatenate(
        [asp["c2"]["w"], _center(asp["c3"]["w"]),
         _center(asp["c4"]["w"]), _center(asp["c5"]["w"])], axis=1)        # (C2, 4*mid)
    b_px = jnp.concatenate(
        [asp["c2"]["b"], asp["c3"]["b"], asp["c4"]["b"], asp["c5"]["b"]])  # (4*mid,)

    wb = asp["bottleneck"]["w"]                                            # (5*mid, mid)
    wb_gap, wb_px = wb[:mid, :], wb[mid:, :]
    b_bott = asp["bottleneck"]["b"]

    w2 = params["conv2"]["w"]                                              # (2*mid, mid)
    w2a, w2b = w2[:mid, :], w2[mid:, :]

    # Constant bilinear upsample matrix, transposed for channels-first use:
    # up_cf = (w2b^T @ a_cf) @ U^T, U^T shape (P2, P1).  Exact in bf16.
    uh = _bilinear_matrix(H, H2, align_corners=False)                      # (H, H2)
    uw = _bilinear_matrix(W, W2, align_corners=False)                      # (W, W2)
    u = (uh[:, None, :, None] * uw[None, :, None, :]).reshape(P1, P2)
    ut = u.T                                                               # (P2, P1)

    # ---- channels-first activations: NCHW flatten is a pure reshape ----
    x1f = x1_nchw.reshape(N, C1, P1).astype(bf16)
    x2f = x2_nchw.reshape(N, C2, P2).astype(bf16)

    col = lambda v: v.reshape(-1, 1).astype(f32)                           # per-channel bias column

    operands = (
        x1f, x2f, ut.astype(bf16),
        params["conv1"]["w"].T.astype(bf16), col(params["conv1"]["b"]),
        asp["c1"]["w"].T.astype(bf16),       col(asp["c1"]["b"]),
        w_px.T.astype(bf16),                 col(b_px),
        wb_gap.T.astype(bf16), wb_px.T.astype(bf16), col(b_bott),
        w2a.T.astype(bf16), w2b.T.astype(bf16), col(params["conv2"]["b"]),
        params["conv3"]["w"].T.astype(bf16), col(params["conv3"]["b"]),
    )

    def _const(arr):   # full-array block, same for every grid step
        return pl.BlockSpec(arr.shape, lambda b: (0,) * arr.ndim)

    in_specs = [
        pl.BlockSpec((1, C1, P1), lambda b: (b, 0, 0)),
        pl.BlockSpec((1, C2, P2), lambda b: (b, 0, 0)),
    ] + [_const(a) for a in operands[2:]]

    # Advisory cost estimate: this kernel is launch/latency-bound; let XLA overlap it.
    mm = lambda m, k, n: 2 * m * k * n
    flops = N * (mm(mid, C1, P1) + mm(mid, C2, P2) + mm(mid, mid, P2)
                 + mm(4 * mid, C2, P2) + mm(mid, 4 * mid, P2)
                 + mm(mid, mid, P2) + mm(mid, P2, P1)
                 + mm(mid, mid, P1) + mm(n_cls, mid, P1))
    bytes_accessed = (sum(int(a.size) * a.dtype.itemsize for a in operands)
                      + N * P1 * (n_cls + mid) * 4)
    cost = pl.CostEstimate(flops=int(flops), transcendentals=0,
                           bytes_accessed=int(bytes_accessed))

    seg_flat, seg_feat_flat = pl.pallas_call(
        _seg_fused_kernel,
        out_shape=(
            jax.ShapeDtypeStruct((N, n_cls, P1), f32),
            jax.ShapeDtypeStruct((N, mid, P1), f32),
        ),
        grid=(N,),
        in_specs=in_specs,
        out_specs=(
            pl.BlockSpec((1, n_cls, P1), lambda b: (b, 0, 0)),
            pl.BlockSpec((1, mid, P1), lambda b: (b, 0, 0)),
        ),
        compiler_params=pltpu.CompilerParams(dimension_semantics=("parallel",)),
        cost_estimate=cost,
    )(*operands)

    # Channels-first outputs -> NCHW is a free reshape (no transposes).
    seg = seg_flat.reshape(N, n_cls, H, W)
    seg_feat = seg_feat_flat.reshape(N, mid, H, W)
    return seg, seg_feat


# --------------------------------------------------------------------------- #
if __name__ == "__main__":
    key = jax.random.PRNGKey(0)
    k_p, k_x1, k_x2 = jax.random.split(key, 3)

    params = make_params(k_p, in_channel=128, mid_channel=64)

    # x1 feeds SegModule.conv1 (64 channels); x2 feeds ASPP (128 channels).
    x1 = jax.random.normal(k_x1, (2, 64, 16, 16), jnp.float32)
    x2 = jax.random.normal(k_x2, (2, 128, 8, 8), jnp.float32)

    seg, seg_feat = jax.jit(seg_module_forward)(x1, x2, params)
    jax.block_until_ready((seg, seg_feat))

    assert seg.shape == (2, 2, 16, 16), seg.shape
    assert seg_feat.shape == (2, 64, 16, 16), seg_feat.shape
    assert bool(jnp.all(jnp.isfinite(seg))) and bool(jnp.all(jnp.isfinite(seg_feat)))
    print("KERNEL_OK")
</pallas_src>

<mosaic_0001>
module attributes {stable_mosaic.version = 11 : i64} {
  func.func @_seg_fused_kernel(%arg0: i32, %arg1: memref<1x64x256xbf16, #tpu.memory_space<vmem>>, %arg2: memref<1x128x64xbf16, #tpu.memory_space<vmem>>, %arg3: memref<64x256xbf16, #tpu.memory_space<vmem>>, %arg4: memref<64x64xbf16, #tpu.memory_space<vmem>>, %arg5: memref<64x1xf32, #tpu.memory_space<vmem>>, %arg6: memref<64x128xbf16, #tpu.memory_space<vmem>>, %arg7: memref<64x1xf32, #tpu.memory_space<vmem>>, %arg8: memref<256x128xbf16, #tpu.memory_space<vmem>>, %arg9: memref<256x1xf32, #tpu.memory_space<vmem>>, %arg10: memref<64x64xbf16, #tpu.memory_space<vmem>>, %arg11: memref<64x256xbf16, #tpu.memory_space<vmem>>, %arg12: memref<64x1xf32, #tpu.memory_space<vmem>>, %arg13: memref<64x64xbf16, #tpu.memory_space<vmem>>, %arg14: memref<64x64xbf16, #tpu.memory_space<vmem>>, %arg15: memref<64x1xf32, #tpu.memory_space<vmem>>, %arg16: memref<2x64xbf16, #tpu.memory_space<vmem>>, %arg17: memref<2x1xf32, #tpu.memory_space<vmem>>, %arg18: memref<1x2x256xf32, #tpu.memory_space<vmem>>, %arg19: memref<1x64x256xf32, #tpu.memory_space<vmem>>) attributes {dimension_semantics = [#tpu.dimension_semantics<parallel>], iteration_bounds = array<i64: 2>, scalar_prefetch = 0 : i64, scratch_operands = 0 : i64, tpu.core_type = #tpu.core_type<tc>, window_params = [{transform_indices = @transform_0, window_bounds = array<i64: 1, 64, 256>}, {transform_indices = @transform_1, window_bounds = array<i64: 1, 128, 64>}, {pipeline_mode = #tpu.pipeline_mode<synchronous>, transform_indices = @transform_2, window_bounds = array<i64: 64, 256>}, {pipeline_mode = #tpu.pipeline_mode<synchronous>, transform_indices = @transform_3, window_bounds = array<i64: 64, 64>}, {pipeline_mode = #tpu.pipeline_mode<synchronous>, transform_indices = @transform_4, window_bounds = array<i64: 64, 1>}, {pipeline_mode = #tpu.pipeline_mode<synchronous>, transform_indices = @transform_5, window_bounds = array<i64: 64, 128>}, {pipeline_mode = #tpu.pipeline_mode<synchronous>, transform_indices = @transform_6, window_bounds = array<i64: 64, 1>}, {pipeline_mode = #tpu.pipeline_mode<synchronous>, transform_indices = @transform_7, window_bounds = array<i64: 256, 128>}, {pipeline_mode = #tpu.pipeline_mode<synchronous>, transform_indices = @transform_8, window_bounds = array<i64: 256, 1>}, {pipeline_mode = #tpu.pipeline_mode<synchronous>, transform_indices = @transform_9, window_bounds = array<i64: 64, 64>}, {pipeline_mode = #tpu.pipeline_mode<synchronous>, transform_indices = @transform_10, window_bounds = array<i64: 64, 256>}, {pipeline_mode = #tpu.pipeline_mode<synchronous>, transform_indices = @transform_11, window_bounds = array<i64: 64, 1>}, {pipeline_mode = #tpu.pipeline_mode<synchronous>, transform_indices = @transform_12, window_bounds = array<i64: 64, 64>}, {pipeline_mode = #tpu.pipeline_mode<synchronous>, transform_indices = @transform_13, window_bounds = array<i64: 64, 64>}, {pipeline_mode = #tpu.pipeline_mode<synchronous>, transform_indices = @transform_14, window_bounds = array<i64: 64, 1>}, {pipeline_mode = #tpu.pipeline_mode<synchronous>, transform_indices = @transform_15, window_bounds = array<i64: 2, 64>}, {pipeline_mode = #tpu.pipeline_mode<synchronous>, transform_indices = @transform_16, window_bounds = array<i64: 2, 1>}, {transform_indices = @transform_17, window_bounds = array<i64: 1, 2, 256>}, {transform_indices = @transform_18, window_bounds = array<i64: 1, 64, 256>}]} {
    %c0 = arith.constant 0 : index
    %c0_0 = arith.constant 0 : index
    %c0_1 = arith.constant 0 : index
    %0 = vector.load %arg1[%c0, %c0_0, %c0_1] : memref<1x64x256xbf16, #tpu.memory_space<vmem>>, vector<1x64x256xbf16>
    %1 = vector.shape_cast %0 : vector<1x64x256xbf16> to vector<64x256xbf16>
    %c0_2 = arith.constant 0 : index
    %c0_3 = arith.constant 0 : index
    %2 = vector.load %arg4[%c0_2, %c0_3] : memref<64x64xbf16, #tpu.memory_space<vmem>>, vector<64x64xbf16>
    %cst = arith.constant dense<0.000000e+00> : vector<64x256xf32>
    %3 = tpu.matmul %2, %1, %cst {dimension_numbers = #tpu.dot_dimension_numbers<[1], [0], [0], [1], [0, 0, 1, 1], [], []>} : vector<64x64xbf16>, vector<64x256xbf16>, vector<64x256xf32> -> vector<64x256xf32>
    %c0_4 = arith.constant 0 : index
    %c0_5 = arith.constant 0 : index
    %4 = vector.load %arg5[%c0_4, %c0_5] : memref<64x1xf32, #tpu.memory_space<vmem>>, vector<64x1xf32>
    %5 = vector.broadcast %4 : vector<64x1xf32> to vector<64x256xf32>
    %6 = arith.addf %3, %5 : vector<64x256xf32>
    %cst_6 = arith.constant 0.000000e+00 : f32
    %7 = vector.broadcast %cst_6 : f32 to vector<64x256xf32>
    %8 = arith.cmpf oge, %6, %7 : vector<64x256xf32>
    %cst_7 = arith.constant 2.000000e-01 : f32
    %9 = vector.broadcast %cst_7 : f32 to vector<64x256xf32>
    %10 = arith.mulf %9, %6 : vector<64x256xf32>
    %11 = arith.select %8, %6, %10 : vector<64x256xi1>, vector<64x256xf32>
    %c0_8 = arith.constant 0 : index
    %c0_9 = arith.constant 0 : index
    %c0_10 = arith.constant 0 : index
    %12 = vector.load %arg2[%c0_8, %c0_9, %c0_10] : memref<1x128x64xbf16, #tpu.memory_space<vmem>>, vector<1x128x64xbf16>
    %13 = vector.shape_cast %12 : vector<1x128x64xbf16> to vector<128x64xbf16>
    %14 = arith.extf %13 : vector<128x64xbf16> to vector<128x64xf32>
    %cst_11 = arith.constant dense<0.000000e+00> : vector<128xf32>
    %15 = vector.multi_reduction <add>, %14, %cst_11 [1] : vector<128x64xf32> to vector<128xf32>
    %16 = vector.shape_cast %15 : vector<128xf32> to vector<128x1xf32>
    %cst_12 = arith.constant 6.400000e+01 : f32
    %17 = vector.broadcast %cst_12 : f32 to vector<128x1xf32>
    %18 = arith.divf %16, %17 : vector<128x1xf32>
    %19 = vector.shape_cast %18 : vector<128x1xf32> to vector<128x1xf32>
    %20 = vector.broadcast %19 : vector<128x1xf32> to vector<128x64xf32>
    %21 = arith.truncf %20 : vector<128x64xf32> to vector<128x64xbf16>
    %c0_13 = arith.constant 0 : index
    %c0_14 = arith.constant 0 : index
    %22 = vector.load %arg6[%c0_13, %c0_14] : memref<64x128xbf16, #tpu.memory_space<vmem>>, vector<64x128xbf16>
    %cst_15 = arith.constant dense<0.000000e+00> : vector<64x64xf32>
    %23 = tpu.matmul %22, %21, %cst_15 {dimension_numbers = #tpu.dot_dimension_numbers<[1], [0], [0], [1], [0, 0, 1, 1], [], []>} : vector<64x128xbf16>, vector<128x64xbf16>, vector<64x64xf32> -> vector<64x64xf32>
    %c0_16 = arith.constant 0 : index
    %c0_17 = arith.constant 0 : index
    %24 = vector.load %arg7[%c0_16, %c0_17] : memref<64x1xf32, #tpu.memory_space<vmem>>, vector<64x1xf32>
    %25 = vector.broadcast %24 : vector<64x1xf32> to vector<64x64xf32>
    %26 = arith.addf %23, %25 : vector<64x64xf32>
    %cst_18 = arith.constant 0.000000e+00 : f32
    %27 = vector.broadcast %cst_18 : f32 to vector<64x64xf32>
    %28 = arith.cmpf oge, %26, %27 : vector<64x64xf32>
    %cst_19 = arith.constant 2.000000e-01 : f32
    %29 = vector.broadcast %cst_19 : f32 to vector<64x64xf32>
    %30 = arith.mulf %29, %26 : vector<64x64xf32>
    %31 = arith.select %28, %26, %30 : vector<64x64xi1>, vector<64x64xf32>
    %c0_20 = arith.constant 0 : index
    %c0_21 = arith.constant 0 : index
    %32 = vector.load %arg10[%c0_20, %c0_21] : memref<64x64xbf16, #tpu.memory_space<vmem>>, vector<64x64xbf16>
    %33 = arith.truncf %31 : vector<64x64xf32> to vector<64x64xbf16>
    %cst_22 = arith.constant dense<0.000000e+00> : vector<64x64xf32>
    %34 = tpu.matmul %32, %33, %cst_22 {dimension_numbers = #tpu.dot_dimension_numbers<[1], [0], [0], [1], [0, 0, 1, 1], [], []>} : vector<64x64xbf16>, vector<64x64xbf16>, vector<64x64xf32> -> vector<64x64xf32>
    %c0_23 = arith.constant 0 : index
    %c0_24 = arith.constant 0 : index
    %35 = vector.load %arg8[%c0_23, %c0_24] : memref<256x128xbf16, #tpu.memory_space<vmem>>, vector<256x128xbf16>
    %cst_25 = arith.constant dense<0.000000e+00> : vector<256x64xf32>
    %36 = tpu.matmul %35, %13, %cst_25 {dimension_numbers = #tpu.dot_dimension_numbers<[1], [0], [0], [1], [0, 0, 1, 1], [], []>} : vector<256x128xbf16>, vector<128x64xbf16>, vector<256x64xf32> -> vector<256x64xf32>
    %c0_26 = arith.constant 0 : index
    %c0_27 = arith.constant 0 : index
    %37 = vector.load %arg9[%c0_26, %c0_27] : memref<256x1xf32, #tpu.memory_space<vmem>>, vector<256x1xf32>
    %38 = vector.broadcast %37 : vector<256x1xf32> to vector<256x64xf32>
    %39 = arith.addf %36, %38 : vector<256x64xf32>
    %cst_28 = arith.constant 0.000000e+00 : f32
    %40 = vector.broadcast %cst_28 : f32 to vector<256x64xf32>
    %41 = arith.cmpf oge, %39, %40 : vector<256x64xf32>
    %cst_29 = arith.constant 2.000000e-01 : f32
    %42 = vector.broadcast %cst_29 : f32 to vector<256x64xf32>
    %43 = arith.mulf %42, %39 : vector<256x64xf32>
    %44 = arith.select %41, %39, %43 : vector<256x64xi1>, vector<256x64xf32>
    %c0_30 = arith.constant 0 : index
    %c0_31 = arith.constant 0 : index
    %45 = vector.load %arg11[%c0_30, %c0_31] : memref<64x256xbf16, #tpu.memory_space<vmem>>, vector<64x256xbf16>
    %46 = arith.truncf %44 : vector<256x64xf32> to vector<256x64xbf16>
    %cst_32 = arith.constant dense<0.000000e+00> : vector<64x64xf32>
    %47 = tpu.matmul %45, %46, %cst_32 {dimension_numbers = #tpu.dot_dimension_numbers<[1], [0], [0], [1], [0, 0, 1, 1], [], []>} : vector<64x256xbf16>, vector<256x64xbf16>, vector<64x64xf32> -> vector<64x64xf32>
    %48 = arith.addf %47, %34 : vector<64x64xf32>
    %c0_33 = arith.constant 0 : index
    %c0_34 = arith.constant 0 : index
    %49 = vector.load %arg12[%c0_33, %c0_34] : memref<64x1xf32, #tpu.memory_space<vmem>>, vector<64x1xf32>
    %50 = vector.broadcast %49 : vector<64x1xf32> to vector<64x64xf32>
    %51 = arith.addf %48, %50 : vector<64x64xf32>
    %cst_35 = arith.constant 0.000000e+00 : f32
    %52 = vector.broadcast %cst_35 : f32 to vector<64x64xf32>
    %53 = arith.cmpf oge, %51, %52 : vector<64x64xf32>
    %cst_36 = arith.constant 2.000000e-01 : f32
    %54 = vector.broadcast %cst_36 : f32 to vector<64x64xf32>
    %55 = arith.mulf %54, %51 : vector<64x64xf32>
    %56 = arith.select %53, %51, %55 : vector<64x64xi1>, vector<64x64xf32>
    %c0_37 = arith.constant 0 : index
    %c0_38 = arith.constant 0 : index
    %57 = vector.load %arg14[%c0_37, %c0_38] : memref<64x64xbf16, #tpu.memory_space<vmem>>, vector<64x64xbf16>
    %58 = arith.truncf %56 : vector<64x64xf32> to vector<64x64xbf16>
    %cst_39 = arith.constant dense<0.000000e+00> : vector<64x64xf32>
    %59 = tpu.matmul %57, %58, %cst_39 {dimension_numbers = #tpu.dot_dimension_numbers<[1], [0], [0], [1], [0, 0, 1, 1], [], []>} : vector<64x64xbf16>, vector<64x64xbf16>, vector<64x64xf32> -> vector<64x64xf32>
    %60 = arith.truncf %59 : vector<64x64xf32> to vector<64x64xbf16>
    %c0_40 = arith.constant 0 : index
    %c0_41 = arith.constant 0 : index
    %61 = vector.load %arg3[%c0_40, %c0_41] : memref<64x256xbf16, #tpu.memory_space<vmem>>, vector<64x256xbf16>
    %cst_42 = arith.constant dense<0.000000e+00> : vector<64x256xf32>
    %62 = tpu.matmul %60, %61, %cst_42 {dimension_numbers = #tpu.dot_dimension_numbers<[1], [0], [0], [1], [0, 0, 1, 1], [], []>} : vector<64x64xbf16>, vector<64x256xbf16>, vector<64x256xf32> -> vector<64x256xf32>
    %c0_43 = arith.constant 0 : index
    %c0_44 = arith.constant 0 : index
    %63 = vector.load %arg13[%c0_43, %c0_44] : memref<64x64xbf16, #tpu.memory_space<vmem>>, vector<64x64xbf16>
    %64 = arith.truncf %11 : vector<64x256xf32> to vector<64x256xbf16>
    %cst_45 = arith.constant dense<0.000000e+00> : vector<64x256xf32>
    %65 = tpu.matmul %63, %64, %cst_45 {dimension_numbers = #tpu.dot_dimension_numbers<[1], [0], [0], [1], [0, 0, 1, 1], [], []>} : vector<64x64xbf16>, vector<64x256xbf16>, vector<64x256xf32> -> vector<64x256xf32>
    %66 = arith.addf %65, %62 : vector<64x256xf32>
    %c0_46 = arith.constant 0 : index
    %c0_47 = arith.constant 0 : index
    %67 = vector.load %arg15[%c0_46, %c0_47] : memref<64x1xf32, #tpu.memory_space<vmem>>, vector<64x1xf32>
    %68 = vector.broadcast %67 : vector<64x1xf32> to vector<64x256xf32>
    %69 = arith.addf %66, %68 : vector<64x256xf32>
    %cst_48 = arith.constant 0.000000e+00 : f32
    %70 = vector.broadcast %cst_48 : f32 to vector<64x256xf32>
    %71 = arith.cmpf oge, %69, %70 : vector<64x256xf32>
    %cst_49 = arith.constant 2.000000e-01 : f32
    %72 = vector.broadcast %cst_49 : f32 to vector<64x256xf32>
    %73 = arith.mulf %72, %69 : vector<64x256xf32>
    %74 = arith.select %71, %69, %73 : vector<64x256xi1>, vector<64x256xf32>
    %c0_50 = arith.constant 0 : index
    %c0_51 = arith.constant 0 : index
    %c0_52 = arith.constant 0 : index
    %75 = vector.load %arg19[%c0_50, %c0_51, %c0_52] : memref<1x64x256xf32, #tpu.memory_space<vmem>>, vector<1x64x256xf32>
    %76 = vector.shape_cast %75 : vector<1x64x256xf32> to vector<64x256xf32>
    %77 = vector.shape_cast %74 : vector<64x256xf32> to vector<1x64x256xf32>
    tpu.vector_store %arg19[%c0_50, %c0_51, %c0_52], %77 {strides = array<i32>} : memref<1x64x256xf32, #tpu.memory_space<vmem>>, vector<1x64x256xf32>,
    %c0_53 = arith.constant 0 : index
    %c0_54 = arith.constant 0 : index
    %78 = vector.load %arg16[%c0_53, %c0_54] : memref<2x64xbf16, #tpu.memory_space<vmem>>, vector<2x64xbf16>
    %79 = arith.truncf %74 : vector<64x256xf32> to vector<64x256xbf16>
    %cst_55 = arith.constant dense<0.000000e+00> : vector<2x256xf32>
    %80 = tpu.matmul %78, %79, %cst_55 {dimension_numbers = #tpu.dot_dimension_numbers<[1], [0], [0], [1], [0, 0, 1, 1], [], []>} : vector<2x64xbf16>, vector<64x256xbf16>, vector<2x256xf32> -> vector<2x256xf32>
    %c0_56 = arith.constant 0 : index
    %c0_57 = arith.constant 0 : index
    %81 = vector.load %arg17[%c0_56, %c0_57] : memref<2x1xf32, #tpu.memory_space<vmem>>, vector<2x1xf32>
    %82 = vector.broadcast %81 : vector<2x1xf32> to vector<2x256xf32>
    %83 = arith.addf %80, %82 : vector<2x256xf32>
    %c0_58 = arith.constant 0 : index
    %c0_59 = arith.constant 0 : index
    %c0_60 = arith.constant 0 : index
    %84 = vector.load %arg18[%c0_58, %c0_59, %c0_60] : memref<1x2x256xf32, #tpu.memory_space<vmem>>, vector<1x2x256xf32>
    %85 = vector.shape_cast %84 : vector<1x2x256xf32> to vector<2x256xf32>
    %86 = vector.shape_cast %83 : vector<2x256xf32> to vector<1x2x256xf32>
    tpu.vector_store %arg18[%c0_58, %c0_59, %c0_60], %86 {strides = array<i32>} : memref<1x2x256xf32, #tpu.memory_space<vmem>>, vector<1x2x256xf32>,
    return
  }
  func.func @transform_0(%arg0: i32) -> (i32, i32, i32) {
    %c0_i32 = arith.constant 0 : i32
    %c0_i32_0 = arith.constant 0 : i32
    %c0_i32_1 = arith.constant 0 : i32
    return %arg0, %c0_i32, %c0_i32_0 : i32, i32, i32
  }
  func.func @transform_1(%arg0: i32) -> (i32, i32, i32) {
    %c0_i32 = arith.constant 0 : i32
    %c0_i32_0 = arith.constant 0 : i32
    %c0_i32_1 = arith.constant 0 : i32
    return %arg0, %c0_i32, %c0_i32_0 : i32, i32, i32
  }
  func.func @transform_2(%arg0: i32) -> (i32, i32) {
    %c0_i32 = arith.constant 0 : i32
    %c0_i32_0 = arith.constant 0 : i32
    %c0_i32_1 = arith.constant 0 : i32
    return %c0_i32, %c0_i32_0 : i32, i32
  }
  func.func @transform_3(%arg0: i32) -> (i32, i32) {
    %c0_i32 = arith.constant 0 : i32
    %c0_i32_0 = arith.constant 0 : i32
    %c0_i32_1 = arith.constant 0 : i32
    return %c0_i32, %c0_i32_0 : i32, i32
  }
  func.func @transform_4(%arg0: i32) -> (i32, i32) {
    %c0_i32 = arith.constant 0 : i32
    %c0_i32_0 = arith.constant 0 : i32
    %c0_i32_1 = arith.constant 0 : i32
    return %c0_i32, %c0_i32_0 : i32, i32
  }
  func.func @transform_5(%arg0: i32) -> (i32, i32) {
    %c0_i32 = arith.constant 0 : i32
    %c0_i32_0 = arith.constant 0 : i32
    %c0_i32_1 = arith.constant 0 : i32
    return %c0_i32, %c0_i32_0 : i32, i32
  }
  func.func @transform_6(%arg0: i32) -> (i32, i32) {
    %c0_i32 = arith.constant 0 : i32
    %c0_i32_0 = arith.constant 0 : i32
    %c0_i32_1 = arith.constant 0 : i32
    return %c0_i32, %c0_i32_0 : i32, i32
  }
  func.func @transform_7(%arg0: i32) -> (i32, i32) {
    %c0_i32 = arith.constant 0 : i32
    %c0_i32_0 = arith.constant 0 : i32
    %c0_i32_1 = arith.constant 0 : i32
    return %c0_i32, %c0_i32_0 : i32, i32
  }
  func.func @transform_8(%arg0: i32) -> (i32, i32) {
    %c0_i32 = arith.constant 0 : i32
    %c0_i32_0 = arith.constant 0 : i32
    %c0_i32_1 = arith.constant 0 : i32
    return %c0_i32, %c0_i32_0 : i32, i32
  }
  func.func @transform_9(%arg0: i32) -> (i32, i32) {
    %c0_i32 = arith.constant 0 : i32
    %c0_i32_0 = arith.constant 0 : i32
    %c0_i32_1 = arith.constant 0 : i32
    return %c0_i32, %c0_i32_0 : i32, i32
  }
  func.func @transform_10(%arg0: i32) -> (i32, i32) {
    %c0_i32 = arith.constant 0 : i32
    %c0_i32_0 = arith.constant 0 : i32
    %c0_i32_1 = arith.constant 0 : i32
    return %c0_i32, %c0_i32_0 : i32, i32
  }
  func.func @transform_11(%arg0: i32) -> (i32, i32) {
    %c0_i32 = arith.constant 0 : i32
    %c0_i32_0 = arith.constant 0 : i32
    %c0_i32_1 = arith.constant 0 : i32
    return %c0_i32, %c0_i32_0 : i32, i32
  }
  func.func @transform_12(%arg0: i32) -> (i32, i32) {
    %c0_i32 = arith.constant 0 : i32
    %c0_i32_0 = arith.constant 0 : i32
    %c0_i32_1 = arith.constant 0 : i32
    return %c0_i32, %c0_i32_0 : i32, i32
  }
  func.func @transform_13(%arg0: i32) -> (i32, i32) {
    %c0_i32 = arith.constant 0 : i32
    %c0_i32_0 = arith.constant 0 : i32
    %c0_i32_1 = arith.constant 0 : i32
    return %c0_i32, %c0_i32_0 : i32, i32
  }
  func.func @transform_14(%arg0: i32) -> (i32, i32) {
    %c0_i32 = arith.constant 0 : i32
    %c0_i32_0 = arith.constant 0 : i32
    %c0_i32_1 = arith.constant 0 : i32
    return %c0_i32, %c0_i32_0 : i32, i32
  }
  func.func @transform_15(%arg0: i32) -> (i32, i32) {
    %c0_i32 = arith.constant 0 : i32
    %c0_i32_0 = arith.constant 0 : i32
    %c0_i32_1 = arith.constant 0 : i32
    return %c0_i32, %c0_i32_0 : i32, i32
  }
  func.func @transform_16(%arg0: i32) -> (i32, i32) {
    %c0_i32 = arith.constant 0 : i32
    %c0_i32_0 = arith.constant 0 : i32
    %c0_i32_1 = arith.constant 0 : i32
    return %c0_i32, %c0_i32_0 : i32, i32
  }
  func.func @transform_17(%arg0: i32) -> (i32, i32, i32) {
    %c0_i32 = arith.constant 0 : i32
    %c0_i32_0 = arith.constant 0 : i32
    %c0_i32_1 = arith.constant 0 : i32
    return %arg0, %c0_i32, %c0_i32_0 : i32, i32, i32
  }
  func.func @transform_18(%arg0: i32) -> (i32, i32, i32) {
    %c0_i32 = arith.constant 0 : i32
    %c0_i32_0 = arith.constant 0 : i32
    %c0_i32_1 = arith.constant 0 : i32
    return %arg0, %c0_i32, %c0_i32_0 : i32, i32, i32
  }
}

</mosaic_0001>

<llo_original>
// kernel: seg_module_forward.1
$region0: #{seg_module_forward.1}
  #allocation0 [shape = 'u32[]', space=smem, size = 0x4, offset = 0x4, fixed_abs, tag = 'smem constant byte address 0x4 - core index']
  #allocation1 [shape = 'u32[144,128]{1,0:T(1,128)}', space=vmem, size = 0x12000, scoped, tag = 'internal scratch']
  %s0 = inlined_call_operand.vmem [shape: bf16[2,64,256], index: 0, kind: input, shape index: {}]
  %s1 = inlined_call_operand.vmem [shape: bf16[2,128,64], index: 1, kind: input, shape index: {}]
  %s2 = inlined_call_operand.vmem [shape: bf16[64,256], index: 2, kind: input, shape index: {}]
  %s3 = inlined_call_operand.vmem [shape: bf16[64,64], index: 3, kind: input, shape index: {}]
  %s4 = inlined_call_operand.vmem [shape: f32[64,1], index: 4, kind: input, shape index: {}]
  %s5 = inlined_call_operand.vmem [shape: bf16[64,128], index: 5, kind: input, shape index: {}]
  %s6 = inlined_call_operand.vmem [shape: f32[64,1], index: 6, kind: input, shape index: {}]
  %s7 = inlined_call_operand.vmem [shape: bf16[256,128], index: 7, kind: input, shape index: {}]
  %s8 = inlined_call_operand.vmem [shape: f32[256,1], index: 8, kind: input, shape index: {}]
  %s9 = inlined_call_operand.vmem [shape: bf16[64,64], index: 9, kind: input, shape index: {}]
  %s10 = inlined_call_operand.vmem [shape: bf16[64,256], index: 10, kind: input, shape index: {}]
  %s11 = inlined_call_operand.vmem [shape: f32[64,1], index: 11, kind: input, shape index: {}]
  %s12 = inlined_call_operand.vmem [shape: bf16[64,64], index: 12, kind: input, shape index: {}]
  %s13 = inlined_call_operand.vmem [shape: bf16[64,64], index: 13, kind: input, shape index: {}]
  %s14 = inlined_call_operand.vmem [shape: f32[64,1], index: 14, kind: input, shape index: {}]
  %s15 = inlined_call_operand.vmem [shape: bf16[2,64], index: 15, kind: input, shape index: {}]
  %s16 = inlined_call_operand.vmem [shape: f32[2,1], index: 16, kind: input, shape index: {}]
  %s17 = inlined_call_operand.vmem [shape: f32[2,2,256], index: 17, kind: output, shape index: {0}]
  %s18 = inlined_call_operand.vmem [shape: f32[2,64,256], index: 18, kind: output, shape index: {1}]
  %19 = xla_tuple %s17, %s18
  %s20 = sld [smem:[#allocation0]]
  $region109: #{seg_module_forward.1} parent=0
    _
  %s22 = ssub.s32 1, %s20
  %s23 = scalar_select 0, %s22, %s20
  loop: start=0, step=1, limit=4
  $region2: #{seg_module_forward.1} parent=0 // loop_pre_header
    _
  $region3: #{seg_module_forward.1} parent=0 // loop_header
    %s25 = sphi 0, %s29
    %p26 = scmp.ge.s32.totalorder %s25, 4
    %s35 = sphi 0, %s37
    %s38 = sphi 0, %s35
    %s39 = sphi 0, %s38
    %s55 = sphi 0, %s39
    %s61 = sphi 0, %s63
    %s64 = sphi 0, %s61
    %s65 = sphi 0, %s64
    %s81 = sphi 0, %s65
    %s85 = sphi 0, %s85
    %s87 = sphi 0, %s85
    %s88 = sphi 0, %s87
    %s102 = sphi 0, %s88
    %s106 = sphi 0, %s106
    %s108 = sphi 0, %s106
    %s109 = sphi 0, %s108
    %s123 = sphi 0, %s109
    %s127 = sphi 0, %s127
    %s129 = sphi 0, %s127
    %s130 = sphi 0, %s129
    %s144 = sphi 0, %s130
    %s148 = sphi 0, %s148
    %s150 = sphi 0, %s148
    %s151 = sphi 0, %s150
    %s165 = sphi 0, %s151
    %s169 = sphi 0, %s169
    %s171 = sphi 0, %s169
    %s172 = sphi 0, %s171
    %s186 = sphi 0, %s172
    %s190 = sphi 0, %s190
    %s192 = sphi 0, %s190
    %s193 = sphi 0, %s192
    %s207 = sphi 0, %s193
    %s211 = sphi 0, %s211
    %s213 = sphi 0, %s211
    %s214 = sphi 0, %s213
    %s228 = sphi 0, %s214
    %s232 = sphi 0, %s232
    %s234 = sphi 0, %s232
    %s235 = sphi 0, %s234
    %s249 = sphi 0, %s235
    %s253 = sphi 0, %s253
    %s255 = sphi 0, %s253
    %s256 = sphi 0, %s255
    %s270 = sphi 0, %s256
    %s274 = sphi 0, %s274
    %s276 = sphi 0, %s274
    %s277 = sphi 0, %s276
    %s291 = sphi 0, %s277
    %s295 = sphi 0, %s295
    %s297 = sphi 0, %s295
    %s298 = sphi 0, %s297
    %s312 = sphi 0, %s298
    %s316 = sphi 0, %s316
    %s318 = sphi 0, %s316
    %s319 = sphi 0, %s318
    %s333 = sphi 0, %s319
    %s337 = sphi 0, %s337
    %s339 = sphi 0, %s337
    %s340 = sphi 0, %s339
    %s354 = sphi 0, %s340
    %s358 = sphi 0, %s358
    %s360 = sphi 0, %s358
    %s361 = sphi 0, %s360
    %s375 = sphi 0, %s361
    %s379 = sphi 0, %s379
    %s381 = sphi 0, %s379
    %s382 = sphi 0, %s381
    %s396 = sphi 0, %s382
    %s402 = sphi 0, %s404
    %s405 = sphi 0, %s402
    %s406 = sphi 0, %s405
    %s422 = sphi 0, %s406
    %s428 = sphi 0, %s430
    %s431 = sphi 0, %s428
    %s432 = sphi 0, %s431
    %s448 = sphi 0, %s432
  $region4: #{seg_module_forward.1} parent=0 // loop_header_branch
    %28 = sbr.rel (%p26) target = $region8
  $region5: #{seg_module_forward.1} parent=0 // loop_body
    %s30 = ssub.s32 %s25, 1
    %s31 = ssub.s32 %s25, 2
    %s32 = sadd.s32 %s25, 1
    %s33 = ssub.s32 %s25, %s32
    %p34 = scmp.eq.s32.totalorder %s33, 0
    %s36 = sadd.s32 %s35, 1
    %s37 = scalar_select %p34, %s35, %s36
    %p40 = pneg %p34
    %p41 = scmp.eq.s32.totalorder %s25, 1
    %p42 = por %p40, %p41
    %p43 = scmp.ne.s32.totalorder %s35, %s38
    %p44 = scmp.eq.s32.totalorder %s25, 0
    %p45 = por %p43, %p44
    %p46 = scmp.ne.s32.totalorder %s35, %s38
    %p47 = scmp.eq.s32.totalorder %s30, 1
    %p48 = por %p46, %p47
    %p49 = scmp.ne.s32.totalorder %s38, %s39
    %p50 = scmp.eq.s32.totalorder %s30, 0
    %p51 = por %p49, %p50
    %p52 = scmp.ne.s32.totalorder %s38, %s39
    %p53 = scmp.eq.s32.totalorder %s31, 1
    %p54 = por %p52, %p53
    %p56 = scmp.ne.s32.totalorder %s39, %s55
    %p57 = scmp.eq.s32.totalorder %s31, 0
    %p58 = por %p56, %p57
    %s59 = ssub.s32 %s25, %s32
    %p60 = scmp.eq.s32.totalorder %s59, 0
    %s62 = sadd.s32 %s61, 1
    %s63 = scalar_select %p60, %s61, %s62
    %p66 = pneg %p60
    %p67 = scmp.eq.s32.totalorder %s25, 1
    %p68 = por %p66, %p67
    %p69 = scmp.ne.s32.totalorder %s61, %s64
    %p70 = scmp.eq.s32.totalorder %s25, 0
    %p71 = por %p69, %p70
    %p72 = scmp.ne.s32.totalorder %s61, %s64
    %p73 = scmp.eq.s32.totalorder %s30, 1
    %p74 = por %p72, %p73
    %p75 = scmp.ne.s32.totalorder %s64, %s65
    %p76 = scmp.eq.s32.totalorder %s30, 0
    %p77 = por %p75, %p76
    %p78 = scmp.ne.s32.totalorder %s64, %s65
    %p79 = scmp.eq.s32.totalorder %s31, 1
    %p80 = por %p78, %p79
    %p82 = scmp.ne.s32.totalorder %s65, %s81
    %p83 = scmp.eq.s32.totalorder %s31, 0
    %p84 = por %p82, %p83
    %s86 = sadd.s32 %s85, 1
    %p89 = scmp.eq.s32.totalorder %s25, 1
    %p90 = scmp.ne.s32.totalorder %s85, %s87
    %p91 = scmp.eq.s32.totalorder %s25, 0
    %p92 = por %p90, %p91
    %p93 = scmp.ne.s32.totalorder %s85, %s87
    %p94 = scmp.eq.s32.totalorder %s30, 1
    %p95 = por %p93, %p94
    %p96 = scmp.ne.s32.totalorder %s87, %s88
    %p97 = scmp.eq.s32.totalorder %s30, 0
    %p98 = por %p96, %p97
    %p99 = scmp.ne.s32.totalorder %s87, %s88
    %p100 = scmp.eq.s32.totalorder %s31, 1
    %p101 = por %p99, %p100
    %p103 = scmp.ne.s32.totalorder %s88, %s102
    %p104 = scmp.eq.s32.totalorder %s31, 0
    %p105 = por %p103, %p104
    %s107 = sadd.s32 %s106, 1
    %p110 = scmp.eq.s32.totalorder %s25, 1
    %p111 = scmp.ne.s32.totalorder %s106, %s108
    %p112 = scmp.eq.s32.totalorder %s25, 0
    %p113 = por %p111, %p112
    %p114 = scmp.ne.s32.totalorder %s106, %s108
    %p115 = scmp.eq.s32.totalorder %s30, 1
    %p116 = por %p114, %p115
    %p117 = scmp.ne.s32.totalorder %s108, %s109
    %p118 = scmp.eq.s32.totalorder %s30, 0
    %p119 = por %p117, %p118
    %p120 = scmp.ne.s32.totalorder %s108, %s109
    %p121 = scmp.eq.s32.totalorder %s31, 1
    %p122 = por %p120, %p121
    %p124 = scmp.ne.s32.totalorder %s109, %s123
    %p125 = scmp.eq.s32.totalorder %s31, 0
    %p126 = por %p124, %p125
    %s128 = sadd.s32 %s127, 1
    %p131 = scmp.eq.s32.totalorder %s25, 1
    %p132 = scmp.ne.s32.totalorder %s127, %s129
    %p133 = scmp.eq.s32.totalorder %s25, 0
    %p134 = por %p132, %p133
    %p135 = scmp.ne.s32.totalorder %s127, %s129
    %p136 = scmp.eq.s32.totalorder %s30, 1
    %p137 = por %p135, %p136
    %p138 = scmp.ne.s32.totalorder %s129, %s130
    %p139 = scmp.eq.s32.totalorder %s30, 0
    %p140 = por %p138, %p139
    %p141 = scmp.ne.s32.totalorder %s129, %s130
    %p142 = scmp.eq.s32.totalorder %s31, 1
    %p143 = por %p141, %p142
    %p145 = scmp.ne.s32.totalorder %s130, %s144
    %p146 = scmp.eq.s32.totalorder %s31, 0
    %p147 = por %p145, %p146
    %s149 = sadd.s32 %s148, 1
    %p152 = scmp.eq.s32.totalorder %s25, 1
    %p153 = scmp.ne.s32.totalorder %s148, %s150
    %p154 = scmp.eq.s32.totalorder %s25, 0
    %p155 = por %p153, %p154
    %p156 = scmp.ne.s32.totalorder %s148, %s150
    %p157 = scmp.eq.s32.totalorder %s30, 1
    %p158 = por %p156, %p157
    %p159 = scmp.ne.s32.totalorder %s150, %s151
    %p160 = scmp.eq.s32.totalorder %s30, 0
    %p161 = por %p159, %p160
    %p162 = scmp.ne.s32.totalorder %s150, %s151
    %p163 = scmp.eq.s32.totalorder %s31, 1
    %p164 = por %p162, %p163
    %p166 = scmp.ne.s32.totalorder %s151, %s165
    %p167 = scmp.eq.s32.totalorder %s31, 0
    %p168 = por %p166, %p167
    %s170 = sadd.s32 %s169, 1
    %p173 = scmp.eq.s32.totalorder %s25, 1
    %p174 = scmp.ne.s32.totalorder %s169, %s171
    %p175 = scmp.eq.s32.totalorder %s25, 0
    %p176 = por %p174, %p175
    %p177 = scmp.ne.s32.totalorder %s169, %s171
    %p178 = scmp.eq.s32.totalorder %s30, 1
    %p179 = por %p177, %p178
    %p180 = scmp.ne.s32.totalorder %s171, %s172
    %p181 = scmp.eq.s32.totalorder %s30, 0
    %p182 = por %p180, %p181
    %p183 = scmp.ne.s32.totalorder %s171, %s172
    %p184 = scmp.eq.s32.totalorder %s31, 1
    %p185 = por %p183, %p184
    %p187 = scmp.ne.s32.totalorder %s172, %s186
    %p188 = scmp.eq.s32.totalorder %s31, 0
    %p189 = por %p187, %p188
    %s191 = sadd.s32 %s190, 1
    %p194 = scmp.eq.s32.totalorder %s25, 1
    %p195 = scmp.ne.s32.totalorder %s190, %s192
    %p196 = scmp.eq.s32.totalorder %s25, 0
    %p197 = por %p195, %p196
    %p198 = scmp.ne.s32.totalorder %s190, %s192
    %p199 = scmp.eq.s32.totalorder %s30, 1
    %p200 = por %p198, %p199
    %p201 = scmp.ne.s32.totalorder %s192, %s193
    %p202 = scmp.eq.s32.totalorder %s30, 0
    %p203 = por %p201, %p202
    %p204 = scmp.ne.s32.totalorder %s192, %s193
    %p205 = scmp.eq.s32.totalorder %s31, 1
    %p206 = por %p204, %p205
    %p208 = scmp.ne.s32.totalorder %s193, %s207
    %p209 = scmp.eq.s32.totalorder %s31, 0
    %p210 = por %p208, %p209
    %s212 = sadd.s32 %s211, 1
    %p215 = scmp.eq.s32.totalorder %s25, 1
    %p216 = scmp.ne.s32.totalorder %s211, %s213
    %p217 = scmp.eq.s32.totalorder %s25, 0
    %p218 = por %p216, %p217
    %p219 = scmp.ne.s32.totalorder %s211, %s213
    %p220 = scmp.eq.s32.totalorder %s30, 1
    %p221 = por %p219, %p220
    %p222 = scmp.ne.s32.totalorder %s213, %s214
    %p223 = scmp.eq.s32.totalorder %s30, 0
    %p224 = por %p222, %p223
    %p225 = scmp.ne.s32.totalorder %s213, %s214
    %p226 = scmp.eq.s32.totalorder %s31, 1
    %p227 = por %p225, %p226
    %p229 = scmp.ne.s32.totalorder %s214, %s228
    %p230 = scmp.eq.s32.totalorder %s31, 0
    %p231 = por %p229, %p230
    %s233 = sadd.s32 %s232, 1
    %p236 = scmp.eq.s32.totalorder %s25, 1
    %p237 = scmp.ne.s32.totalorder %s232, %s234
    %p238 = scmp.eq.s32.totalorder %s25, 0
    %p239 = por %p237, %p238
    %p240 = scmp.ne.s32.totalorder %s232, %s234
    %p241 = scmp.eq.s32.totalorder %s30, 1
    %p242 = por %p240, %p241
    %p243 = scmp.ne.s32.totalorder %s234, %s235
    %p244 = scmp.eq.s32.totalorder %s30, 0
    %p245 = por %p243, %p244
    %p246 = scmp.ne.s32.totalorder %s234, %s235
    %p247 = scmp.eq.s32.totalorder %s31, 1
    %p248 = por %p246, %p247
    %p250 = scmp.ne.s32.totalorder %s235, %s249
    %p251 = scmp.eq.s32.totalorder %s31, 0
    %p252 = por %p250, %p251
    %s254 = sadd.s32 %s253, 1
    %p257 = scmp.eq.s32.totalorder %s25, 1
    %p258 = scmp.ne.s32.totalorder %s253, %s255
    %p259 = scmp.eq.s32.totalorder %s25, 0
    %p260 = por %p258, %p259
    %p261 = scmp.ne.s32.totalorder %s253, %s255
    %p262 = scmp.eq.s32.totalorder %s30, 1
    %p263 = por %p261, %p262
    %p264 = scmp.ne.s32.totalorder %s255, %s256
    %p265 = scmp.eq.s32.totalorder %s30, 0
    %p266 = por %p264, %p265
    %p267 = scmp.ne.s32.totalorder %s255, %s256
    %p268 = scmp.eq.s32.totalorder %s31, 1
    %p269 = por %p267, %p268
    %p271 = scmp.ne.s32.totalorder %s256, %s270
    %p272 = scmp.eq.s32.totalorder %s31, 0
    %p273 = por %p271, %p272
    %s275 = sadd.s32 %s274, 1
    %p278 = scmp.eq.s32.totalorder %s25, 1
    %p279 = scmp.ne.s32.totalorder %s274, %s276
    %p280 = scmp.eq.s32.totalorder %s25, 0
    %p281 = por %p279, %p280
    %p282 = scmp.ne.s32.totalorder %s274, %s276
    %p283 = scmp.eq.s32.totalorder %s30, 1
    %p284 = por %p282, %p283
    %p285 = scmp.ne.s32.totalorder %s276, %s277
    %p286 = scmp.eq.s32.totalorder %s30, 0
    %p287 = por %p285, %p286
    %p288 = scmp.ne.s32.totalorder %s276, %s277
    %p289 = scmp.eq.s32.totalorder %s31, 1
    %p290 = por %p288, %p289
    %p292 = scmp.ne.s32.totalorder %s277, %s291
    %p293 = scmp.eq.s32.totalorder %s31, 0
    %p294 = por %p292, %p293
    %s296 = sadd.s32 %s295, 1
    %p299 = scmp.eq.s32.totalorder %s25, 1
    %p300 = scmp.ne.s32.totalorder %s295, %s297
    %p301 = scmp.eq.s32.totalorder %s25, 0
    %p302 = por %p300, %p301
    %p303 = scmp.ne.s32.totalorder %s295, %s297
    %p304 = scmp.eq.s32.totalorder %s30, 1
    %p305 = por %p303, %p304
    %p306 = scmp.ne.s32.totalorder %s297, %s298
    %p307 = scmp.eq.s32.totalorder %s30, 0
    %p308 = por %p306, %p307
    %p309 = scmp.ne.s32.totalorder %s297, %s298
    %p310 = scmp.eq.s32.totalorder %s31, 1
    %p311 = por %p309, %p310
    %p313 = scmp.ne.s32.totalorder %s298, %s312
    %p314 = scmp.eq.s32.totalorder %s31, 0
    %p315 = por %p313, %p314
    %s317 = sadd.s32 %s316, 1
    %p320 = scmp.eq.s32.totalorder %s25, 1
    %p321 = scmp.ne.s32.totalorder %s316, %s318
    %p322 = scmp.eq.s32.totalorder %s25, 0
    %p323 = por %p321, %p322
    %p324 = scmp.ne.s32.totalorder %s316, %s318
    %p325 = scmp.eq.s32.totalorder %s30, 1
    %p326 = por %p324, %p325
    %p327 = scmp.ne.s32.totalorder %s318, %s319
    %p328 = scmp.eq.s32.totalorder %s30, 0
    %p329 = por %p327, %p328
    %p330 = scmp.ne.s32.totalorder %s318, %s319
    %p331 = scmp.eq.s32.totalorder %s31, 1
    %p332 = por %p330, %p331
    %p334 = scmp.ne.s32.totalorder %s319, %s333
    %p335 = scmp.eq.s32.totalorder %s31, 0
    %p336 = por %p334, %p335
    %s338 = sadd.s32 %s337, 1
    %p341 = scmp.eq.s32.totalorder %s25, 1
    %p342 = scmp.ne.s32.totalorder %s337, %s339
    %p343 = scmp.eq.s32.totalorder %s25, 0
    %p344 = por %p342, %p343
    %p345 = scmp.ne.s32.totalorder %s337, %s339
    %p346 = scmp.eq.s32.totalorder %s30, 1
    %p347 = por %p345, %p346
    %p348 = scmp.ne.s32.totalorder %s339, %s340
    %p349 = scmp.eq.s32.totalorder %s30, 0
    %p350 = por %p348, %p349
    %p351 = scmp.ne.s32.totalorder %s339, %s340
    %p352 = scmp.eq.s32.totalorder %s31, 1
    %p353 = por %p351, %p352
    %p355 = scmp.ne.s32.totalorder %s340, %s354
    %p356 = scmp.eq.s32.totalorder %s31, 0
    %p357 = por %p355, %p356
    %s359 = sadd.s32 %s358, 1
    %p362 = scmp.eq.s32.totalorder %s25, 1
    %p363 = scmp.ne.s32.totalorder %s358, %s360
    %p364 = scmp.eq.s32.totalorder %s25, 0
    %p365 = por %p363, %p364
    %p366 = scmp.ne.s32.totalorder %s358, %s360
    %p367 = scmp.eq.s32.totalorder %s30, 1
    %p368 = por %p366, %p367
    %p369 = scmp.ne.s32.totalorder %s360, %s361
    %p370 = scmp.eq.s32.totalorder %s30, 0
    %p371 = por %p369, %p370
    %p372 = scmp.ne.s32.totalorder %s360, %s361
    %p373 = scmp.eq.s32.totalorder %s31, 1
    %p374 = por %p372, %p373
    %p376 = scmp.ne.s32.totalorder %s361, %s375
    %p377 = scmp.eq.s32.totalorder %s31, 0
    %p378 = por %p376, %p377
    %s380 = sadd.s32 %s379, 1
    %p383 = scmp.eq.s32.totalorder %s25, 1
    %p384 = scmp.ne.s32.totalorder %s379, %s381
    %p385 = scmp.eq.s32.totalorder %s25, 0
    %p386 = por %p384, %p385
    %p387 = scmp.ne.s32.totalorder %s379, %s381
    %p388 = scmp.eq.s32.totalorder %s30, 1
    %p389 = por %p387, %p388
    %p390 = scmp.ne.s32.totalorder %s381, %s382
    %p391 = scmp.eq.s32.totalorder %s30, 0
    %p392 = por %p390, %p391
    %p393 = scmp.ne.s32.totalorder %s381, %s382
    %p394 = scmp.eq.s32.totalorder %s31, 1
    %p395 = por %p393, %p394
    %p397 = scmp.ne.s32.totalorder %s382, %s396
    %p398 = scmp.eq.s32.totalorder %s31, 0
    %p399 = por %p397, %p398
    %s400 = ssub.s32 %s25, %s32
    %p401 = scmp.eq.s32.totalorder %s400, 0
    %s403 = sadd.s32 %s402, 1
    %s404 = scalar_select %p401, %s402, %s403
    %p407 = pneg %p401
    %p408 = scmp.eq.s32.totalorder %s25, 1
    %p409 = por %p407, %p408
    %p410 = scmp.ne.s32.totalorder %s402, %s405
    %p411 = scmp.eq.s32.totalorder %s25, 0
    %p412 = por %p410, %p411
    %p413 = scmp.ne.s32.totalorder %s402, %s405
    %p414 = scmp.eq.s32.totalorder %s30, 1
    %p415 = por %p413, %p414
    %p416 = scmp.ne.s32.totalorder %s405, %s406
    %p417 = scmp.eq.s32.totalorder %s30, 0
    %p418 = por %p416, %p417
    %p419 = scmp.ne.s32.totalorder %s405, %s406
    %p420 = scmp.eq.s32.totalorder %s31, 1
    %p421 = por %p419, %p420
    %p423 = scmp.ne.s32.totalorder %s406, %s422
    %p424 = scmp.eq.s32.totalorder %s31, 0
    %p425 = por %p423, %p424
    %s426 = ssub.s32 %s25, %s32
    %p427 = scmp.eq.s32.totalorder %s426, 0
    %s429 = sadd.s32 %s428, 1
    %s430 = scalar_select %p427, %s428, %s429
    %p433 = pneg %p427
    %p434 = scmp.eq.s32.totalorder %s25, 1
    %p435 = por %p433, %p434
    %p436 = scmp.ne.s32.totalorder %s428, %s431
    %p437 = scmp.eq.s32.totalorder %s25, 0
    %p438 = por %p436, %p437
    %p439 = scmp.ne.s32.totalorder %s428, %s431
    %p440 = scmp.eq.s32.totalorder %s30, 1
    %p441 = por %p439, %p440
    %p442 = scmp.ne.s32.totalorder %s431, %s432
    %p443 = scmp.eq.s32.totalorder %s30, 0
    %p444 = por %p442, %p443
    %p445 = scmp.ne.s32.totalorder %s431, %s432
    %p446 = scmp.eq.s32.totalorder %s31, 1
    %p447 = por %p445, %p446
    %p449 = scmp.ne.s32.totalorder %s432, %s448
    %p450 = scmp.eq.s32.totalorder %s31, 0
    %p451 = por %p449, %p450
    %p452 = scmp.le.s32.totalorder 1, %s25
    %p453 = scmp.lt.s32.totalorder %s25, 3
    %p454 = pnand %p452, %p453
    %p455 = pneg %p454
    // Predicated region
    $region9: #{seg_module_forward.1} parent=5 // pred_check
      _
    $region10: #{seg_module_forward.1} parent=5 // pred_check_branch
      %457 = sbr.rel (%p454) target = $region12
    $region11: #{seg_module_forward.1} parent=5 // pred_region
      %s458 = ssub.s32 %s25, 1
      // Predicated region
      $region13: #{seg_module_forward.1} parent=11 // pred_check
        %p459 = pneg %p98
      $region14: #{seg_module_forward.1} parent=11 // pred_check_branch
        %461 = sbr.rel (%p459) target = $region16
      $region15: #{seg_module_forward.1} parent=11 // pred_region
        _
      $region16: #{seg_module_forward.1} parent=11 // pred_fallthru
        _
      // Predicated region
      $region17: #{seg_module_forward.1} parent=11 // pred_check
        %p462 = pneg %p119
      $region18: #{seg_module_forward.1} parent=11 // pred_check_branch
        %464 = sbr.rel (%p462) target = $region20
      $region19: #{seg_module_forward.1} parent=11 // pred_region
        _
      $region20: #{seg_module_forward.1} parent=11 // pred_fallthru
        _
      // Predicated region
      $region21: #{seg_module_forward.1} parent=11 // pred_check
        %p465 = pneg %p140
      $region22: #{seg_module_forward.1} parent=11 // pred_check_branch
        %467 = sbr.rel (%p465) target = $region24
      $region23: #{seg_module_forward.1} parent=11 // pred_region
        _
      $region24: #{seg_module_forward.1} parent=11 // pred_fallthru
        _
      // Predicated region
      $region25: #{seg_module_forward.1} parent=11 // pred_check
        %p468 = pneg %p161
      $region26: #{seg_module_forward.1} parent=11 // pred_check_branch
        %470 = sbr.rel (%p468) target = $region28
      $region27: #{seg_module_forward.1} parent=11 // pred_region
        _
      $region28: #{seg_module_forward.1} parent=11 // pred_fallthru
        _
      // Predicated region
      $region29: #{seg_module_forward.1} parent=11 // pred_check
        %p471 = pneg %p182
      $region30: #{seg_module_forward.1} parent=11 // pred_check_branch
        %473 = sbr.rel (%p471) target = $region32
      $region31: #{seg_module_forward.1} parent=11 // pred_region
        _
      $region32: #{seg_module_forward.1} parent=11 // pred_fallthru
        _
      // Predicated region
      $region33: #{seg_module_forward.1} parent=11 // pred_check
        %p474 = pneg %p203
      $region34: #{seg_module_forward.1} parent=11 // pred_check_branch
        %476 = sbr.rel (%p474) target = $region36
      $region35: #{seg_module_forward.1} parent=11 // pred_region
        _
      $region36: #{seg_module_forward.1} parent=11 // pred_fallthru
        _
      // Predicated region
      $region37: #{seg_module_forward.1} parent=11 // pred_check
        %p477 = pneg %p224
      $region38: #{seg_module_forward.1} parent=11 // pred_check_branch
        %479 = sbr.rel (%p477) target = $region40
      $region39: #{seg_module_forward.1} parent=11 // pred_region
        _
      $region40: #{seg_module_forward.1} parent=11 // pred_fallthru
        _
      // Predicated region
      $region41: #{seg_module_forward.1} parent=11 // pred_check
        %p480 = pneg %p245
      $region42: #{seg_module_forward.1} parent=11 // pred_check_branch
        %482 = sbr.rel (%p480) target = $region44
      $region43: #{seg_module_forward.1} parent=11 // pred_region
        _
      $region44: #{seg_module_forward.1} parent=11 // pred_fallthru
        _
      // Predicated region
      $region45: #{seg_module_forward.1} parent=11 // pred_check
        %p483 = pneg %p266
      $region46: #{seg_module_forward.1} parent=11 // pred_check_branch
        %485 = sbr.rel (%p483) target = $region48
      $region47: #{seg_module_forward.1} parent=11 // pred_region
        _
      $region48: #{seg_module_forward.1} parent=11 // pred_fallthru
        _
      // Predicated region
      $region49: #{seg_module_forward.1} parent=11 // pred_check
        %p486 = pneg %p287
      $region50: #{seg_module_forward.1} parent=11 // pred_check_branch
        %488 = sbr.rel (%p486) target = $region52
      $region51: #{seg_module_forward.1} parent=11 // pred_region
        _
      $region52: #{seg_module_forward.1} parent=11 // pred_fallthru
        _
      // Predicated region
      $region53: #{seg_module_forward.1} parent=11 // pred_check
        %p489 = pneg %p308
      $region54: #{seg_module_forward.1} parent=11 // pred_check_branch
        %491 = sbr.rel (%p489) target = $region56
      $region55: #{seg_module_forward.1} parent=11 // pred_region
        _
      $region56: #{seg_module_forward.1} parent=11 // pred_fallthru
        _
      // Predicated region
      $region57: #{seg_module_forward.1} parent=11 // pred_check
        %p492 = pneg %p329
      $region58: #{seg_module_forward.1} parent=11 // pred_check_branch
        %494 = sbr.rel (%p492) target = $region60
      $region59: #{seg_module_forward.1} parent=11 // pred_region
        _
      $region60: #{seg_module_forward.1} parent=11 // pred_fallthru
        _
      // Predicated region
      $region61: #{seg_module_forward.1} parent=11 // pred_check
        %p495 = pneg %p350
      $region62: #{seg_module_forward.1} parent=11 // pred_check_branch
        %497 = sbr.rel (%p495) target = $region64
      $region63: #{seg_module_forward.1} parent=11 // pred_region
        _
      $region64: #{seg_module_forward.1} parent=11 // pred_fallthru
        _
      // Predicated region
      $region65: #{seg_module_forward.1} parent=11 // pred_check
        %p498 = pneg %p371
      $region66: #{seg_module_forward.1} parent=11 // pred_check_branch
        %500 = sbr.rel (%p498) target = $region68
      $region67: #{seg_module_forward.1} parent=11 // pred_region
        _
      $region68: #{seg_module_forward.1} parent=11 // pred_fallthru
        _
      // Predicated region
      $region69: #{seg_module_forward.1} parent=11 // pred_check
        %p501 = pneg %p392
      $region70: #{seg_module_forward.1} parent=11 // pred_check_branch
        %503 = sbr.rel (%p501) target = $region72
      $region71: #{seg_module_forward.1} parent=11 // pred_region
        _
      $region72: #{seg_module_forward.1} parent=11 // pred_fallthru
        _
    $region12: #{seg_module_forward.1} parent=5 // pred_fallthru
      _
    %p504 = scmp.lt.s32.totalorder %s25, 2
    // Predicated region
    $region73: #{seg_module_forward.1} parent=5 // pred_check
      %p505 = pneg %p504
    $region74: #{seg_module_forward.1} parent=5 // pred_check_branch
      %507 = sbr.rel (%p505) target = $region76
    $region75: #{seg_module_forward.1} parent=5 // pred_region
      // Predicated region
      $region77: #{seg_module_forward.1} parent=75 // pred_check
        %p508 = pneg %p45
      $region78: #{seg_module_forward.1} parent=75 // pred_check_branch
        %510 = sbr.rel (%p508) target = $region80
      $region79: #{seg_module_forward.1} parent=75 // pred_region
        %p511 = scmp.lt.s32.totalorder %s25, 1
        %s512 = scalar_select %p511, %s25, 1
        %s513 = smul.addr %s512, 16
        %s514 = smul.addr %s513, 4
        %s515 = scalar_lea.vmem %s0, %s514
      $region80: #{seg_module_forward.1} parent=75 // pred_fallthru
        _
      // Predicated region
      $region81: #{seg_module_forward.1} parent=75 // pred_check
        %p516 = pneg %p71
      $region82: #{seg_module_forward.1} parent=75 // pred_check_branch
        %518 = sbr.rel (%p516) target = $region84
      $region83: #{seg_module_forward.1} parent=75 // pred_region
        %p519 = scmp.lt.s32.totalorder %s25, 1
        %s520 = scalar_select %p519, %s25, 1
        %s521 = smul.addr %s520, 16
        %s522 = smul.addr %s521, 4
        %s523 = scalar_lea.vmem %s1, %s522
      $region84: #{seg_module_forward.1} parent=75 // pred_fallthru
        _
    $region76: #{seg_module_forward.1} parent=5 // pred_fallthru
      _
    %p524 = scmp.le.s32.totalorder 1, %s25
    %p525 = scmp.lt.s32.totalorder %s25, 3
    %p526 = pnand %p524, %p525
    %p527 = pneg %p526
    // Predicated region
    $region85: #{seg_module_forward.1} parent=5 // pred_check
      _
    $region86: #{seg_module_forward.1} parent=5 // pred_check_branch
      %529 = sbr.rel (%p526) target = $region88
    $region87: #{seg_module_forward.1} parent=5 // pred_region
      %s530 = ssub.s32 %s25, 1
      %p531 = scmp.lt.s32.totalorder %s30, 1
      %s532 = scalar_select %p531, %s30, 1
      %s533 = smul.addr %s532, 16
      %s534 = smul.addr %s533, 4
      %s535 = scalar_lea.vmem %s0, %s534
      %p536 = pneg %p51
      %p537 = pneg %p48
      %p538 = scmp.lt.s32.totalorder %s30, 1
      %s539 = scalar_select %p538, %s30, 1
      %s540 = smul.addr %s539, 16
      %s541 = smul.addr %s540, 4
      %s542 = scalar_lea.vmem %s1, %s541
      %p543 = pneg %p77
      %p544 = pneg %p74
      %p545 = pneg %p98
      %p546 = pneg %p95
      %p547 = pneg %p119
      %p548 = pneg %p116
      %p549 = pneg %p140
      %p550 = pneg %p137
      %p551 = pneg %p161
      %p552 = pneg %p158
      %p553 = pneg %p182
      %p554 = pneg %p179
      %p555 = pneg %p203
      %p556 = pneg %p200
      %p557 = pneg %p224
      %p558 = pneg %p221
      %p559 = pneg %p245
      %p560 = pneg %p242
      %p561 = pneg %p266
      %p562 = pneg %p263
      %p563 = pneg %p287
      %p564 = pneg %p284
      %p565 = pneg %p308
      %p566 = pneg %p305
      %p567 = pneg %p329
      %p568 = pneg %p326
      %p569 = pneg %p350
      %p570 = pneg %p347
      %p571 = pneg %p371
      %p572 = pneg %p368
      %p573 = pneg %p392
      %p574 = pneg %p389
      %p575 = pneg %p418
      %p576 = pneg %p415
      %p577 = scmp.lt.s32.totalorder %s30, 1
      %s578 = scalar_select %p577, %s30, 1
      %s579 = smul.addr %s578, 2
      %s580 = smul.addr %s579, 2
      %s581 = scalar_lea.vmem %s17, %s580
      %p582 = pneg %p444
      %p583 = pneg %p441
      %p584 = scmp.lt.s32.totalorder %s30, 1
      %s585 = scalar_select %p584, %s30, 1
      %s586 = smul.addr %s585, 16
      %s587 = smul.addr %s586, 8
      %s588 = scalar_lea.vmem %s18, %s587
      %p589 = scmp.lt.s32.totalorder %s30, 1
      %s590 = scalar_select %p589, %s30, 1
      %s591 = smul.addr %s590, 16
      %s592 = smul.addr %s591, 4
      %s593 = scalar_lea.vmem %s0, %s592
      %p594 = scmp.lt.s32.totalorder %s30, 1
      %s595 = scalar_select %p594, %s30, 1
      %s596 = smul.addr %s595, 16
      %s597 = smul.addr %s596, 4
      %s598 = scalar_lea.vmem %s1, %s597
      %p599 = scmp.lt.s32.totalorder %s30, 1
      %s600 = scalar_select %p599, %s30, 1
      %s601 = smul.addr %s600, 2
      %s602 = smul.addr %s601, 2
      %s603 = scalar_lea.vmem %s17, %s602
      %p604 = scmp.lt.s32.totalorder %s30, 1
      %s605 = scalar_select %p604, %s30, 1
      %s606 = smul.addr %s605, 16
      %s607 = smul.addr %s606, 8
      %s608 = scalar_lea.vmem %s18, %s607
      %v610 = vld [vmem:[%s593] sm:$0xff]
      %v611 = vld [vmem:[%s593 + $0x8] sm:$0xff]
      %v612 = vld [vmem:[%s593 + $0x10] sm:$0xff]
      %v613 = vld [vmem:[%s593 + $0x18] sm:$0xff]
      %v614 = vld [vmem:[%s593 + $0x20] sm:$0xff]
      %v615 = vld [vmem:[%s593 + $0x28] sm:$0xff]
      %v616 = vld [vmem:[%s593 + $0x30] sm:$0xff]
      %v617 = vld [vmem:[%s593 + $0x38] sm:$0xff]
      %v618 = vld [vmem:[%s3] sm:$0xf]
      %v619 = vld [vmem:[%s3 + $0x4] sm:$0xf]
      %v620 = vld [vmem:[%s3 + $0x8] sm:$0xf]
      %v621 = vld [vmem:[%s3 + $0xc] sm:$0xf]
      %v622 = vld [vmem:[%s3 + $0x10] sm:$0xf]
      %v623 = vld [vmem:[%s3 + $0x14] sm:$0xf]
      %v624 = vld [vmem:[%s3 + $0x18] sm:$0xf]
      %v625 = vld [vmem:[%s3 + $0x1c] sm:$0xf]
      %v626 = vld [vmem:[%s4] sm:$0xff]
      %v627 = vld [vmem:[%s4 + $0x8] sm:$0xff]
      %v628 = vld [vmem:[%s4 + $0x10] sm:$0xff]
      %v629 = vld [vmem:[%s4 + $0x18] sm:$0xff]
      %v630 = vld [vmem:[%s4 + $0x20] sm:$0xff]
      %v631 = vld [vmem:[%s4 + $0x28] sm:$0xff]
      %v632 = vld [vmem:[%s4 + $0x30] sm:$0xff]
      %v633 = vld [vmem:[%s4 + $0x38] sm:$0xff]
      %635 = vset.pattern.permute.xlu0 0
      %636 = vperm.xlu0 %635, %v626
      %v637 = vpop.permute.xlu0 %636
      %640 = vset.pattern.permute.xlu0 0
      %641 = vperm.xlu0 %640, %v627
      %v642 = vpop.permute.xlu0 %641
      %645 = vset.pattern.permute.xlu0 0
      %646 = vperm.xlu0 %645, %v628
      %v647 = vpop.permute.xlu0 %646
      %650 = vset.pattern.permute.xlu0 0
      %651 = vperm.xlu0 %650, %v629
      %v652 = vpop.permute.xlu0 %651
      %655 = vset.pattern.permute.xlu0 0
      %656 = vperm.xlu0 %655, %v630
      %v657 = vpop.permute.xlu0 %656
      %660 = vset.pattern.permute.xlu0 0
      %661 = vperm.xlu0 %660, %v631
      %v662 = vpop.permute.xlu0 %661
      %665 = vset.pattern.permute.xlu0 0
      %666 = vperm.xlu0 %665, %v632
      %v667 = vpop.permute.xlu0 %666
      %670 = vset.pattern.permute.xlu0 0
      %671 = vperm.xlu0 %670, %v633
      %v672 = vpop.permute.xlu0 %671
      %v682 = vunpack.c.l.b16 %v618
      %v683 = vunpack.c.l.b16 %v619
      %v684 = vunpack.c.l.b16 %v620
      %v685 = vunpack.c.l.b16 %v621
      %v686 = vunpack.c.l.b16 %v622
      %v687 = vunpack.c.l.b16 %v623
      %v688 = vunpack.c.l.b16 %v624
      %v689 = vunpack.c.l.b16 %v625
      %v690 = vpack.c.b16 %v683, %v682
      %v691 = vpack.c.b16 %v685, %v684
      %v692 = vpack.c.b16 %v687, %v686
      %v693 = vpack.c.b16 %v689, %v688
      %v702 = vunpack.c.l.b16 %v610
      %v703 = vunpack.c.h.b16 %v610
      %v704 = vunpack.c.l.b16 %v611
      %v705 = vunpack.c.h.b16 %v611
      %v706 = vunpack.c.l.b16 %v612
      %v707 = vunpack.c.h.b16 %v612
      %v708 = vunpack.c.l.b16 %v613
      %v709 = vunpack.c.h.b16 %v613
      %v710 = vunpack.c.l.b16 %v614
      %v711 = vunpack.c.h.b16 %v614
      %v712 = vunpack.c.l.b16 %v615
      %v713 = vunpack.c.h.b16 %v615
      %v714 = vunpack.c.l.b16 %v616
      %v715 = vunpack.c.h.b16 %v616
      %v716 = vunpack.c.l.b16 %v617
      %v717 = vunpack.c.h.b16 %v617
      %v718 = vpack.c.b16 %v704, %v702
      %v719 = vpack.c.b16 %v705, %v703
      %v720 = vpack.c.b16 %v708, %v706
      %v721 = vpack.c.b16 %v709, %v707
      %v722 = vpack.c.b16 %v712, %v710
      %v723 = vpack.c.b16 %v713, %v711
      %v724 = vpack.c.b16 %v716, %v714
      %v725 = vpack.c.b16 %v717, %v715
      %vm734 = vcmask 523264
      %v736 = vsel %vm734, %v690, 0
      %v739 = vsel %vm734, %v691, 0
      %v742 = vsel %vm734, %v692, 0
      %v745 = vsel %vm734, %v693, 0
      %747 = vmatprep.subr.bf16.mxu0 %v719
      %748 = vmatpush1.bf16.msra.mxu0 %v718
      %749 = vmatprep.subr.bf16.mxu0 %v721
      %750 = vmatpush1.bf16.msra.mxu0 %v720
      %751 = vmatprep.subr.bf16.mxu0 %v723
      %752 = vmatpush1.bf16.msra.mxu0 %v722
      %753 = vmatprep.subr.bf16.mxu0 %v725
      %754 = vmatpush1.bf16.msra.mxu0 %v724
      %755 = vmatprep.subr.bf16.mxu0 0
      %756 = vmatpush1.bf16.msra.mxu0 0
      %757 = vmatprep.subr.bf16.mxu0 0
      %758 = vmatpush1.bf16.msra.mxu0 0
      %759 = vmatprep.subr.bf16.mxu0 0
      %760 = vmatpush1.bf16.msra.mxu0 0
      %761 = vmatprep.subr.bf16.mxu0 0
      %762 = vmatpush1.bf16.msra.mxu0 0
      %763 = vmatprep.subr.bf16.mxu0 0
      %764 = vmatpush1.bf16.msra.mxu0 0
      %765 = vmatprep.subr.bf16.mxu0 0
      %766 = vmatpush1.bf16.msra.mxu0 0
      %767 = vmatprep.subr.bf16.mxu0 0
      %768 = vmatpush1.bf16.msra.mxu0 0
      %769 = vmatprep.subr.bf16.mxu0 0
      %770 = vmatpush1.bf16.msra.mxu0 0
      %771 = vmatprep.subr.bf16.mxu0 0
      %772 = vmatpush1.bf16.msra.mxu0 0
      %773 = vmatprep.subr.bf16.mxu0 0
      %774 = vmatpush1.bf16.msra.mxu0 0
      %775 = vmatprep.subr.bf16.mxu0 0
      %776 = vmatpush1.bf16.msra.mxu0 0
      %777 = vmatprep.subr.bf16.mxu0 0
      %778 = vmatpush1.bf16.msra.mxu0 0
      %779 = vmatprep.mubr.bf16.mxu0 0
      %780 = vmatmul.mubr.bf16.gmra.mrb[0].mxu0 %v736
      %v781 = vpop.f32.mrb[0].mxu0
      %v782 = vadd.f32 %v637, %v781
      %v783 = vpop.f32.mrb[0].mxu0
      %v784 = vadd.f32 %v637, %v783
      %v785 = vpop.f32.mrb[0].mxu0
      %v786 = vadd.f32 %v642, %v785
      %v787 = vpop.f32.mrb[0].mxu0
      %v788 = vadd.f32 %v642, %v787
      %789 = vmatprep.mubr.bf16.mxu0 0
      %790 = vmatmul.mubr.bf16.gmra.mrb[0].mxu0 %v739
      %v791 = vpop.f32.mrb[0].mxu0
      %v792 = vadd.f32 %v647, %v791
      %v793 = vpop.f32.mrb[0].mxu0
      %v794 = vadd.f32 %v647, %v793
      %v795 = vpop.f32.mrb[0].mxu0
      %v796 = vadd.f32 %v652, %v795
      %v797 = vpop.f32.mrb[0].mxu0
      %v798 = vadd.f32 %v652, %v797
      %799 = vmatprep.mubr.bf16.mxu0 0
      %800 = vmatmul.mubr.bf16.gmra.mrb[0].mxu0 %v742
      %v801 = vpop.f32.mrb[0].mxu0
      %v802 = vadd.f32 %v657, %v801
      %v803 = vpop.f32.mrb[0].mxu0
      %v804 = vadd.f32 %v657, %v803
      %v805 = vpop.f32.mrb[0].mxu0
      %v806 = vadd.f32 %v662, %v805
      %v807 = vpop.f32.mrb[0].mxu0
      %v808 = vadd.f32 %v662, %v807
      %809 = vmatprep.mubr.bf16.mxu0 0
      %810 = vmatmul.mubr.bf16.gmra.mrb[0].mxu0 %v745
      %v811 = vpop.f32.mrb[0].mxu0
      %v812 = vadd.f32 %v667, %v811
      %v813 = vpop.f32.mrb[0].mxu0
      %v814 = vadd.f32 %v667, %v813
      %v815 = vpop.f32.mrb[0].mxu0
      %v816 = vadd.f32 %v672, %v815
      %v817 = vpop.f32.mrb[0].mxu0
      %v818 = vadd.f32 %v672, %v817
      %819 = vdwg.mxu0
      %vm820 = vcmp.ge.f32.partialorder %v782, 0.0
      %vm821 = vcmp.ge.f32.partialorder %v784, 0.0
      %vm822 = vcmp.ge.f32.partialorder %v786, 0.0
      %vm823 = vcmp.ge.f32.partialorder %v788, 0.0
      %vm824 = vcmp.ge.f32.partialorder %v792, 0.0
      %vm825 = vcmp.ge.f32.partialorder %v794, 0.0
      %vm826 = vcmp.ge.f32.partialorder %v796, 0.0
      %vm827 = vcmp.ge.f32.partialorder %v798, 0.0
      %vm828 = vcmp.ge.f32.partialorder %v802, 0.0
      %vm829 = vcmp.ge.f32.partialorder %v804, 0.0
      %vm830 = vcmp.ge.f32.partialorder %v806, 0.0
      %vm831 = vcmp.ge.f32.partialorder %v808, 0.0
      %vm832 = vcmp.ge.f32.partialorder %v812, 0.0
      %vm833 = vcmp.ge.f32.partialorder %v814, 0.0
      %vm834 = vcmp.ge.f32.partialorder %v816, 0.0
      %vm835 = vcmp.ge.f32.partialorder %v818, 0.0
      %v836 = vmul.f32 %v782, 0.2
      %v837 = vmul.f32 %v784, 0.2
      %v838 = vmul.f32 %v786, 0.2
      %v839 = vmul.f32 %v788, 0.2
      %v840 = vmul.f32 %v792, 0.2
      %v841 = vmul.f32 %v794, 0.2
      %v842 = vmul.f32 %v796, 0.2
      %v843 = vmul.f32 %v798, 0.2
      %v844 = vmul.f32 %v802, 0.2
      %v845 = vmul.f32 %v804, 0.2
      %v846 = vmul.f32 %v806, 0.2
      %v847 = vmul.f32 %v808, 0.2
      %v848 = vmul.f32 %v812, 0.2
      %v849 = vmul.f32 %v814, 0.2
      %v850 = vmul.f32 %v816, 0.2
      %v851 = vmul.f32 %v818, 0.2
      %v852 = vsel %vm820, %v782, %v836
      %v853 = vsel %vm821, %v784, %v837
      %v854 = vsel %vm822, %v786, %v838
      %v855 = vsel %vm823, %v788, %v839
      %v856 = vsel %vm824, %v792, %v840
      %v857 = vsel %vm825, %v794, %v841
      %v858 = vsel %vm826, %v796, %v842
      %v859 = vsel %vm827, %v798, %v843
      %v860 = vsel %vm828, %v802, %v844
      %v861 = vsel %vm829, %v804, %v845
      %v862 = vsel %vm830, %v806, %v846
      %v863 = vsel %vm831, %v808, %v847
      %v864 = vsel %vm832, %v812, %v848
      %v865 = vsel %vm833, %v814, %v849
      %v866 = vsel %vm834, %v816, %v850
      %v867 = vsel %vm835, %v818, %v851
      %v868 = vld [vmem:[%s598] sm:$0xf]
      %v869 = vld [vmem:[%s598 + $0x4] sm:$0xf]
      %v870 = vld [vmem:[%s598 + $0x8] sm:$0xf]
      %v871 = vld [vmem:[%s598 + $0xc] sm:$0xf]
      %v872 = vld [vmem:[%s598 + $0x10] sm:$0xf]
      %v873 = vld [vmem:[%s598 + $0x14] sm:$0xf]
      %v874 = vld [vmem:[%s598 + $0x18] sm:$0xf]
      %v875 = vld [vmem:[%s598 + $0x1c] sm:$0xf]
      %v876 = vld [vmem:[%s598 + $0x20] sm:$0xf]
      %v877 = vld [vmem:[%s598 + $0x24] sm:$0xf]
      %v878 = vld [vmem:[%s598 + $0x28] sm:$0xf]
      %v879 = vld [vmem:[%s598 + $0x2c] sm:$0xf]
      %v880 = vld [vmem:[%s598 + $0x30] sm:$0xf]
      %v881 = vld [vmem:[%s598 + $0x34] sm:$0xf]
      %v882 = vld [vmem:[%s598 + $0x38] sm:$0xf]
      %v883 = vld [vmem:[%s598 + $0x3c] sm:$0xf]
      %v884 = vunpack.c.l.bf16 %v868
      %v885 = vunpack.c.l.bf16 %v869
      %v886 = vunpack.c.l.bf16 %v870
      %v887 = vunpack.c.l.bf16 %v871
      %v888 = vunpack.c.l.bf16 %v872
      %v889 = vunpack.c.l.bf16 %v873
      %v890 = vunpack.c.l.bf16 %v874
      %v891 = vunpack.c.l.bf16 %v875
      %v892 = vunpack.c.l.bf16 %v876
      %v893 = vunpack.c.l.bf16 %v877
      %v894 = vunpack.c.l.bf16 %v878
      %v895 = vunpack.c.l.bf16 %v879
      %v896 = vunpack.c.l.bf16 %v880
      %v897 = vunpack.c.l.bf16 %v881
      %v898 = vunpack.c.l.bf16 %v882
      %v899 = vunpack.c.l.bf16 %v883
      %v900 = vsel %vm734, %v884, 0.0
      %901 = vadd.xlane.f32.xlu0 %v900
      %v902 = vpop.xlane.xlu0 %901
      %v903 = vsel %vm734, %v885, 0.0
      %904 = vadd.xlane.f32.xlu0 %v903
      %v905 = vpop.xlane.xlu0 %904
      %v906 = vsel %vm734, %v886, 0.0
      %907 = vadd.xlane.f32.xlu0 %v906
      %v908 = vpop.xlane.xlu0 %907
      %v909 = vsel %vm734, %v887, 0.0
      %910 = vadd.xlane.f32.xlu0 %v909
      %v911 = vpop.xlane.xlu0 %910
      %v912 = vsel %vm734, %v888, 0.0
      %913 = vadd.xlane.f32.xlu0 %v912
      %v914 = vpop.xlane.xlu0 %913
      %v915 = vsel %vm734, %v889, 0.0
      %916 = vadd.xlane.f32.xlu0 %v915
      %v917 = vpop.xlane.xlu0 %916
      %v918 = vsel %vm734, %v890, 0.0
      %919 = vadd.xlane.f32.xlu0 %v918
      %v920 = vpop.xlane.xlu0 %919
      %v921 = vsel %vm734, %v891, 0.0
      %922 = vadd.xlane.f32.xlu0 %v921
      %v923 = vpop.xlane.xlu0 %922
      %v924 = vsel %vm734, %v892, 0.0
      %925 = vadd.xlane.f32.xlu0 %v924
      %v926 = vpop.xlane.xlu0 %925
      %v927 = vsel %vm734, %v893, 0.0
      %928 = vadd.xlane.f32.xlu0 %v927
      %v929 = vpop.xlane.xlu0 %928
      %v930 = vsel %vm734, %v894, 0.0
      %931 = vadd.xlane.f32.xlu0 %v930
      %v932 = vpop.xlane.xlu0 %931
      %v933 = vsel %vm734, %v895, 0.0
      %934 = vadd.xlane.f32.xlu0 %v933
      %v935 = vpop.xlane.xlu0 %934
      %v936 = vsel %vm734, %v896, 0.0
      %937 = vadd.xlane.f32.xlu0 %v936
      %v938 = vpop.xlane.xlu0 %937
      %v939 = vsel %vm734, %v897, 0.0
      %940 = vadd.xlane.f32.xlu0 %v939
      %v941 = vpop.xlane.xlu0 %940
      %v942 = vsel %vm734, %v898, 0.0
      %943 = vadd.xlane.f32.xlu0 %v942
      %v944 = vpop.xlane.xlu0 %943
      %v945 = vsel %vm734, %v899, 0.0
      %946 = vadd.xlane.f32.xlu0 %v945
      %v947 = vpop.xlane.xlu0 %946
      %v948 = vrcp.pop 64.0
      %v949 = vmul.f32 %v902, %v948
      %v950 = vmul.f32 %v905, %v948
      %v951 = vmul.f32 %v908, %v948
      %v952 = vmul.f32 %v911, %v948
      %v953 = vmul.f32 %v914, %v948
      %v954 = vmul.f32 %v917, %v948
      %v955 = vmul.f32 %v920, %v948
      %v956 = vmul.f32 %v923, %v948
      %v957 = vmul.f32 %v926, %v948
      %v958 = vmul.f32 %v929, %v948
      %v959 = vmul.f32 %v932, %v948
      %v960 = vmul.f32 %v935, %v948
      %v961 = vmul.f32 %v938, %v948
      %v962 = vmul.f32 %v941, %v948
      %v963 = vmul.f32 %v944, %v948
      %v964 = vmul.f32 %v947, %v948
      %v965 = vpack.c.bf16 %v950, %v949
      %v966 = vpack.c.bf16 %v952, %v951
      %v967 = vpack.c.bf16 %v954, %v953
      %v968 = vpack.c.bf16 %v956, %v955
      %v969 = vpack.c.bf16 %v958, %v957
      %v970 = vpack.c.bf16 %v960, %v959
      %v971 = vpack.c.bf16 %v962, %v961
      %v972 = vpack.c.bf16 %v964, %v963
      %v973 = vld [vmem:[%s5] sm:$0xf]
      %v974 = vld [vmem:[%s5 + $0x4] sm:$0xf]
      %v975 = vld [vmem:[%s5 + $0x8] sm:$0xf]
      %v976 = vld [vmem:[%s5 + $0xc] sm:$0xf]
      %v977 = vld [vmem:[%s5 + $0x10] sm:$0xf]
      %v978 = vld [vmem:[%s5 + $0x14] sm:$0xf]
      %v979 = vld [vmem:[%s5 + $0x18] sm:$0xf]
      %v980 = vld [vmem:[%s5 + $0x1c] sm:$0xf]
      %v981 = vld [vmem:[%s6] sm:$0xff]
      %v982 = vld [vmem:[%s6 + $0x8] sm:$0xff]
      %v983 = vld [vmem:[%s6 + $0x10] sm:$0xff]
      %v984 = vld [vmem:[%s6 + $0x18] sm:$0xff]
      %v985 = vld [vmem:[%s6 + $0x20] sm:$0xff]
      %v986 = vld [vmem:[%s6 + $0x28] sm:$0xff]
      %v987 = vld [vmem:[%s6 + $0x30] sm:$0xff]
      %v988 = vld [vmem:[%s6 + $0x38] sm:$0xff]
      %990 = vset.pattern.permute.xlu0 0
      %991 = vperm.xlu0 %990, %v981
      %v992 = vpop.permute.xlu0 %991
      %995 = vset.pattern.permute.xlu0 0
      %996 = vperm.xlu0 %995, %v982
      %v997 = vpop.permute.xlu0 %996
      %1000 = vset.pattern.permute.xlu0 0
      %1001 = vperm.xlu0 %1000, %v983
      %v1002 = vpop.permute.xlu0 %1001
      %1005 = vset.pattern.permute.xlu0 0
      %1006 = vperm.xlu0 %1005, %v984
      %v1007 = vpop.permute.xlu0 %1006
      %1010 = vset.pattern.permute.xlu0 0
      %1011 = vperm.xlu0 %1010, %v985
      %v1012 = vpop.permute.xlu0 %1011
      %1015 = vset.pattern.permute.xlu0 0
      %1016 = vperm.xlu0 %1015, %v986
      %v1017 = vpop.permute.xlu0 %1016
      %1020 = vset.pattern.permute.xlu0 0
      %1021 = vperm.xlu0 %1020, %v987
      %v1022 = vpop.permute.xlu0 %1021
      %1025 = vset.pattern.permute.xlu0 0
      %1026 = vperm.xlu0 %1025, %v988
      %v1027 = vpop.permute.xlu0 %1026
      %v1037 = vunpack.c.l.b16 %v973
      %v1038 = vunpack.c.l.b16 %v974
      %v1039 = vunpack.c.l.b16 %v975
      %v1040 = vunpack.c.l.b16 %v976
      %v1041 = vunpack.c.l.b16 %v977
      %v1042 = vunpack.c.l.b16 %v978
      %v1043 = vunpack.c.l.b16 %v979
      %v1044 = vunpack.c.l.b16 %v980
      %v1045 = vpack.c.b16 %v1038, %v1037
      %v1046 = vpack.c.b16 %v1040, %v1039
      %v1047 = vpack.c.b16 %v1042, %v1041
      %v1048 = vpack.c.b16 %v1044, %v1043
      %1053 = vmatprep.subr.bf16.mxu0 0
      %1054 = vmatpush1.bf16.msra.mxu0 %v965
      %1055 = vmatprep.subr.bf16.mxu0 0
      %1056 = vmatpush1.bf16.msra.mxu0 %v966
      %1057 = vmatprep.subr.bf16.mxu0 0
      %1058 = vmatpush1.bf16.msra.mxu0 %v967
      %1059 = vmatprep.subr.bf16.mxu0 0
      %1060 = vmatpush1.bf16.msra.mxu0 %v968
      %1061 = vmatprep.subr.bf16.mxu0 0
      %1062 = vmatpush1.bf16.msra.mxu0 %v969
      %1063 = vmatprep.subr.bf16.mxu0 0
      %1064 = vmatpush1.bf16.msra.mxu0 %v970
      %1065 = vmatprep.subr.bf16.mxu0 0
      %1066 = vmatpush1.bf16.msra.mxu0 %v971
      %1067 = vmatprep.subr.bf16.mxu0 0
      %1068 = vmatpush1.bf16.msra.mxu0 %v972
      %1069 = vmatprep.subr.bf16.mxu0 0
      %1070 = vmatpush1.bf16.msra.mxu0 0
      %1071 = vmatprep.subr.bf16.mxu0 0
      %1072 = vmatpush1.bf16.msra.mxu0 0
      %1073 = vmatprep.subr.bf16.mxu0 0
      %1074 = vmatpush1.bf16.msra.mxu0 0
      %1075 = vmatprep.subr.bf16.mxu0 0
      %1076 = vmatpush1.bf16.msra.mxu0 0
      %1077 = vmatprep.subr.bf16.mxu0 0
      %1078 = vmatpush1.bf16.msra.mxu0 0
      %1079 = vmatprep.subr.bf16.mxu0 0
      %1080 = vmatpush1.bf16.msra.mxu0 0
      %1081 = vmatprep.subr.bf16.mxu0 0
      %1082 = vmatpush1.bf16.msra.mxu0 0
      %1083 = vmatprep.subr.bf16.mxu0 0
      %1084 = vmatpush1.bf16.msra.mxu0 0
      %1085 = vmatprep.mubr.bf16.mxu0 0
      %1086 = vmatmul.mubr.bf16.gmra.mrb[0].mxu0 %v1045
      %v1087 = vpop.f32.mrb[0].mxu0
      %v1088 = vadd.f32 %v992, %v1087
      %v1089 = vpop.f32.mrb[0].mxu0
      %v1090 = vpop.f32.mrb[0].mxu0
      %v1091 = vadd.f32 %v997, %v1090
      %v1092 = vpop.f32.mrb[0].mxu0
      %1093 = vmatprep.mubr.bf16.mxu0 0
      %1094 = vmatmul.mubr.bf16.gmra.mrb[0].mxu0 %v1046
      %v1095 = vpop.f32.mrb[0].mxu0
      %v1096 = vadd.f32 %v1002, %v1095
      %v1097 = vpop.f32.mrb[0].mxu0
      %v1098 = vpop.f32.mrb[0].mxu0
      %v1099 = vadd.f32 %v1007, %v1098
      %v1100 = vpop.f32.mrb[0].mxu0
      %1101 = vmatprep.mubr.bf16.mxu0 0
      %1102 = vmatmul.mubr.bf16.gmra.mrb[0].mxu0 %v1047
      %v1103 = vpop.f32.mrb[0].mxu0
      %v1104 = vadd.f32 %v1012, %v1103
      %v1105 = vpop.f32.mrb[0].mxu0
      %v1106 = vpop.f32.mrb[0].mxu0
      %v1107 = vadd.f32 %v1017, %v1106
      %v1108 = vpop.f32.mrb[0].mxu0
      %1109 = vmatprep.mubr.bf16.mxu0 0
      %1110 = vmatmul.mubr.bf16.gmra.mrb[0].mxu0 %v1048
      %v1111 = vpop.f32.mrb[0].mxu0
      %v1112 = vadd.f32 %v1022, %v1111
      %v1113 = vpop.f32.mrb[0].mxu0
      %v1114 = vpop.f32.mrb[0].mxu0
      %v1115 = vadd.f32 %v1027, %v1114
      %v1116 = vpop.f32.mrb[0].mxu0
      %1117 = vdwg.mxu0
      %vm1118 = vcmp.ge.f32.partialorder %v1088, 0.0
      %vm1119 = vcmp.ge.f32.partialorder %v1091, 0.0
      %vm1120 = vcmp.ge.f32.partialorder %v1096, 0.0
      %vm1121 = vcmp.ge.f32.partialorder %v1099, 0.0
      %vm1122 = vcmp.ge.f32.partialorder %v1104, 0.0
      %vm1123 = vcmp.ge.f32.partialorder %v1107, 0.0
      %vm1124 = vcmp.ge.f32.partialorder %v1112, 0.0
      %vm1125 = vcmp.ge.f32.partialorder %v1115, 0.0
      %v1126 = vmul.f32 %v1088, 0.2
      %v1127 = vmul.f32 %v1091, 0.2
      %v1128 = vmul.f32 %v1096, 0.2
      %v1129 = vmul.f32 %v1099, 0.2
      %v1130 = vmul.f32 %v1104, 0.2
      %v1131 = vmul.f32 %v1107, 0.2
      %v1132 = vmul.f32 %v1112, 0.2
      %v1133 = vmul.f32 %v1115, 0.2
      %v1134 = vsel %vm1118, %v1088, %v1126
      %v1135 = vsel %vm1119, %v1091, %v1127
      %v1136 = vsel %vm1120, %v1096, %v1128
      %v1137 = vsel %vm1121, %v1099, %v1129
      %v1138 = vsel %vm1122, %v1104, %v1130
      %v1139 = vsel %vm1123, %v1107, %v1131
      %v1140 = vsel %vm1124, %v1112, %v1132
      %v1141 = vsel %vm1125, %v1115, %v1133
      %v1142 = vld [vmem:[%s9] sm:$0xf]
      %v1143 = vld [vmem:[%s9 + $0x4] sm:$0xf]
      %v1144 = vld [vmem:[%s9 + $0x8] sm:$0xf]
      %v1145 = vld [vmem:[%s9 + $0xc] sm:$0xf]
      %v1146 = vld [vmem:[%s9 + $0x10] sm:$0xf]
      %v1147 = vld [vmem:[%s9 + $0x14] sm:$0xf]
      %v1148 = vld [vmem:[%s9 + $0x18] sm:$0xf]
      %v1149 = vld [vmem:[%s9 + $0x1c] sm:$0xf]
      %v1150 = vpack.c.bf16 %v1135, %v1134
      %v1151 = vpack.c.bf16 %v1137, %v1136
      %v1152 = vpack.c.bf16 %v1139, %v1138
      %v1153 = vpack.c.bf16 %v1141, %v1140
      %v1162 = vunpack.c.l.b16 %v1142
      %v1163 = vunpack.c.l.b16 %v1143
      %v1164 = vunpack.c.l.b16 %v1144
      %v1165 = vunpack.c.l.b16 %v1145
      %v1166 = vunpack.c.l.b16 %v1146
      %v1167 = vunpack.c.l.b16 %v1147
      %v1168 = vunpack.c.l.b16 %v1148
      %v1169 = vunpack.c.l.b16 %v1149
      %v1170 = vpack.c.b16 %v1163, %v1162
      %v1171 = vpack.c.b16 %v1165, %v1164
      %v1172 = vpack.c.b16 %v1167, %v1166
      %v1173 = vpack.c.b16 %v1169, %v1168
      %v1175 = vsel %vm734, %v1170, 0
      %v1178 = vsel %vm734, %v1171, 0
      %v1181 = vsel %vm734, %v1172, 0
      %v1184 = vsel %vm734, %v1173, 0
      %1186 = vmatprep.subr.bf16.mxu0 0
      %1187 = vmatpush1.bf16.msra.mxu0 %v1150
      %1188 = vmatprep.subr.bf16.mxu0 0
      %1189 = vmatpush1.bf16.msra.mxu0 %v1151
      %1190 = vmatprep.subr.bf16.mxu0 0
      %1191 = vmatpush1.bf16.msra.mxu0 %v1152
      %1192 = vmatprep.subr.bf16.mxu0 0
      %1193 = vmatpush1.bf16.msra.mxu0 %v1153
      %1194 = vmatprep.subr.bf16.mxu0 0
      %1195 = vmatpush1.bf16.msra.mxu0 0
      %1196 = vmatprep.subr.bf16.mxu0 0
      %1197 = vmatpush1.bf16.msra.mxu0 0
      %1198 = vmatprep.subr.bf16.mxu0 0
      %1199 = vmatpush1.bf16.msra.mxu0 0
      %1200 = vmatprep.subr.bf16.mxu0 0
      %1201 = vmatpush1.bf16.msra.mxu0 0
      %1202 = vmatprep.subr.bf16.mxu0 0
      %1203 = vmatpush1.bf16.msra.mxu0 0
      %1204 = vmatprep.subr.bf16.mxu0 0
      %1205 = vmatpush1.bf16.msra.mxu0 0
      %1206 = vmatprep.subr.bf16.mxu0 0
      %1207 = vmatpush1.bf16.msra.mxu0 0
      %1208 = vmatprep.subr.bf16.mxu0 0
      %1209 = vmatpush1.bf16.msra.mxu0 0
      %1210 = vmatprep.subr.bf16.mxu0 0
      %1211 = vmatpush1.bf16.msra.mxu0 0
      %1212 = vmatprep.subr.bf16.mxu0 0
      %1213 = vmatpush1.bf16.msra.mxu0 0
      %1214 = vmatprep.subr.bf16.mxu0 0
      %1215 = vmatpush1.bf16.msra.mxu0 0
      %1216 = vmatprep.subr.bf16.mxu0 0
      %1217 = vmatpush1.bf16.msra.mxu0 0
      %1218 = vmatprep.mubr.bf16.mxu0 0
      %1219 = vmatmul.mubr.bf16.gmra.mrb[0].mxu0 %v1175
      %v1220 = vpop.f32.mrb[0].mxu0
      %v1221 = vadd.f32 0.0, %v1220
      %v1222 = vpop.f32.mrb[0].mxu0
      %v1223 = vpop.f32.mrb[0].mxu0
      %v1224 = vadd.f32 0.0, %v1223
      %v1225 = vpop.f32.mrb[0].mxu0
      %1226 = vmatprep.mubr.bf16.mxu0 0
      %1227 = vmatmul.mubr.bf16.gmra.mrb[0].mxu0 %v1178
      %v1228 = vpop.f32.mrb[0].mxu0
      %v1229 = vadd.f32 0.0, %v1228
      %v1230 = vpop.f32.mrb[0].mxu0
      %v1231 = vpop.f32.mrb[0].mxu0
      %v1232 = vadd.f32 0.0, %v1231
      %v1233 = vpop.f32.mrb[0].mxu0
      %1234 = vmatprep.mubr.bf16.mxu0 0
      %1235 = vmatmul.mubr.bf16.gmra.mrb[0].mxu0 %v1181
      %v1236 = vpop.f32.mrb[0].mxu0
      %v1237 = vadd.f32 0.0, %v1236
      %v1238 = vpop.f32.mrb[0].mxu0
      %v1239 = vpop.f32.mrb[0].mxu0
      %v1240 = vadd.f32 0.0, %v1239
      %v1241 = vpop.f32.mrb[0].mxu0
      %1242 = vmatprep.mubr.bf16.mxu0 0
      %1243 = vmatmul.mubr.bf16.gmra.mrb[0].mxu0 %v1184
      %v1244 = vpop.f32.mrb[0].mxu0
      %v1245 = vadd.f32 0.0, %v1244
      %v1246 = vpop.f32.mrb[0].mxu0
      %v1247 = vpop.f32.mrb[0].mxu0
      %v1248 = vadd.f32 0.0, %v1247
      %v1249 = vpop.f32.mrb[0].mxu0
      %1250 = vdwg.mxu0
      %v1251 = vld [vmem:[%s7] sm:$0xf]
      %v1252 = vld [vmem:[%s7 + $0x4] sm:$0xf]
      %v1253 = vld [vmem:[%s7 + $0x8] sm:$0xf]
      %v1254 = vld [vmem:[%s7 + $0xc] sm:$0xf]
      %v1255 = vld [vmem:[%s7 + $0x10] sm:$0xf]
      %v1256 = vld [vmem:[%s7 + $0x14] sm:$0xf]
      %v1257 = vld [vmem:[%s7 + $0x18] sm:$0xf]
      %v1258 = vld [vmem:[%s7 + $0x1c] sm:$0xf]
      %v1259 = vld [vmem:[%s7 + $0x20] sm:$0xf]
      %v1260 = vld [vmem:[%s7 + $0x24] sm:$0xf]
      %v1261 = vld [vmem:[%s7 + $0x28] sm:$0xf]
      %v1262 = vld [vmem:[%s7 + $0x2c] sm:$0xf]
      %v1263 = vld [vmem:[%s7 + $0x30] sm:$0xf]
      %v1264 = vld [vmem:[%s7 + $0x34] sm:$0xf]
      %v1265 = vld [vmem:[%s7 + $0x38] sm:$0xf]
      %v1266 = vld [vmem:[%s7 + $0x3c] sm:$0xf]
      %v1267 = vld [vmem:[%s7 + $0x40] sm:$0xf]
      %v1268 = vld [vmem:[%s7 + $0x44] sm:$0xf]
      %v1269 = vld [vmem:[%s7 + $0x48] sm:$0xf]
      %v1270 = vld [vmem:[%s7 + $0x4c] sm:$0xf]
      %v1271 = vld [vmem:[%s7 + $0x50] sm:$0xf]
      %v1272 = vld [vmem:[%s7 + $0x54] sm:$0xf]
      %v1273 = vld [vmem:[%s7 + $0x58] sm:$0xf]
      %v1274 = vld [vmem:[%s7 + $0x5c] sm:$0xf]
      %v1275 = vld [vmem:[%s7 + $0x60] sm:$0xf]
      %v1276 = vld [vmem:[%s7 + $0x64] sm:$0xf]
      %v1277 = vld [vmem:[%s7 + $0x68] sm:$0xf]
      %v1278 = vld [vmem:[%s7 + $0x6c] sm:$0xf]
      %v1279 = vld [vmem:[%s7 + $0x70] sm:$0xf]
      %v1280 = vld [vmem:[%s7 + $0x74] sm:$0xf]
      %v1281 = vld [vmem:[%s7 + $0x78] sm:$0xf]
      %v1282 = vld [vmem:[%s7 + $0x7c] sm:$0xf]
      %v1283 = vld [vmem:[%s8] sm:$0xff]
      %v1284 = vld [vmem:[%s8 + $0x8] sm:$0xff]
      %v1285 = vld [vmem:[%s8 + $0x10] sm:$0xff]
      %v1286 = vld [vmem:[%s8 + $0x18] sm:$0xff]
      %v1287 = vld [vmem:[%s8 + $0x20] sm:$0xff]
      %v1288 = vld [vmem:[%s8 + $0x28] sm:$0xff]
      %v1289 = vld [vmem:[%s8 + $0x30] sm:$0xff]
      %v1290 = vld [vmem:[%s8 + $0x38] sm:$0xff]
      %v1291 = vld [vmem:[%s8 + $0x40] sm:$0xff]
      %v1292 = vld [vmem:[%s8 + $0x48] sm:$0xff]
      %v1293 = vld [vmem:[%s8 + $0x50] sm:$0xff]
      %v1294 = vld [vmem:[%s8 + $0x58] sm:$0xff]
      %v1295 = vld [vmem:[%s8 + $0x60] sm:$0xff]
      %v1296 = vld [vmem:[%s8 + $0x68] sm:$0xff]
      %v1297 = vld [vmem:[%s8 + $0x70] sm:$0xff]
      %v1298 = vld [vmem:[%s8 + $0x78] sm:$0xff]
      %v1299 = vld [vmem:[%s8 + $0x80] sm:$0xff]
      %v1300 = vld [vmem:[%s8 + $0x88] sm:$0xff]
      %v1301 = vld [vmem:[%s8 + $0x90] sm:$0xff]
      %v1302 = vld [vmem:[%s8 + $0x98] sm:$0xff]
      %v1303 = vld [vmem:[%s8 + $0xa0] sm:$0xff]
      %v1304 = vld [vmem:[%s8 + $0xa8] sm:$0xff]
      %v1305 = vld [vmem:[%s8 + $0xb0] sm:$0xff]
      %v1306 = vld [vmem:[%s8 + $0xb8] sm:$0xff]
      %v1307 = vld [vmem:[%s8 + $0xc0] sm:$0xff]
      %v1308 = vld [vmem:[%s8 + $0xc8] sm:$0xff]
      %v1309 = vld [vmem:[%s8 + $0xd0] sm:$0xff]
      %v1310 = vld [vmem:[%s8 + $0xd8] sm:$0xff]
      %v1311 = vld [vmem:[%s8 + $0xe0] sm:$0xff]
      %v1312 = vld [vmem:[%s8 + $0xe8] sm:$0xff]
      %v1313 = vld [vmem:[%s8 + $0xf0] sm:$0xff]
      %v1314 = vld [vmem:[%s8 + $0xf8] sm:$0xff]
      %1316 = vset.pattern.permute.xlu0 0
      %1317 = vperm.xlu0 %1316, %v1283
      %v1318 = vpop.permute.xlu0 %1317
      %1321 = vset.pattern.permute.xlu0 0
      %1322 = vperm.xlu0 %1321, %v1284
      %v1323 = vpop.permute.xlu0 %1322
      %1326 = vset.pattern.permute.xlu0 0
      %1327 = vperm.xlu0 %1326, %v1285
      %v1328 = vpop.permute.xlu0 %1327
      %1331 = vset.pattern.permute.xlu0 0
      %1332 = vperm.xlu0 %1331, %v1286
      %v1333 = vpop.permute.xlu0 %1332
      %1336 = vset.pattern.permute.xlu0 0
      %1337 = vperm.xlu0 %1336, %v1287
      %v1338 = vpop.permute.xlu0 %1337
      %1341 = vset.pattern.permute.xlu0 0
      %1342 = vperm.xlu0 %1341, %v1288
      %v1343 = vpop.permute.xlu0 %1342
      %1346 = vset.pattern.permute.xlu0 0
      %1347 = vperm.xlu0 %1346, %v1289
      %v1348 = vpop.permute.xlu0 %1347
      %1351 = vset.pattern.permute.xlu0 0
      %1352 = vperm.xlu0 %1351, %v1290
      %v1353 = vpop.permute.xlu0 %1352
      %1356 = vset.pattern.permute.xlu0 0
      %1357 = vperm.xlu0 %1356, %v1291
      %v1358 = vpop.permute.xlu0 %1357
      %1361 = vset.pattern.permute.xlu0 0
      %1362 = vperm.xlu0 %1361, %v1292
      %v1363 = vpop.permute.xlu0 %1362
      %1366 = vset.pattern.permute.xlu0 0
      %1367 = vperm.xlu0 %1366, %v1293
      %v1368 = vpop.permute.xlu0 %1367
      %1371 = vset.pattern.permute.xlu0 0
      %1372 = vperm.xlu0 %1371, %v1294
      %v1373 = vpop.permute.xlu0 %1372
      %1376 = vset.pattern.permute.xlu0 0
      %1377 = vperm.xlu0 %1376, %v1295
      %v1378 = vpop.permute.xlu0 %1377
      %1381 = vset.pattern.permute.xlu0 0
      %1382 = vperm.xlu0 %1381, %v1296
      %v1383 = vpop.permute.xlu0 %1382
      %1386 = vset.pattern.permute.xlu0 0
      %1387 = vperm.xlu0 %1386, %v1297
      %v1388 = vpop.permute.xlu0 %1387
      %1391 = vset.pattern.permute.xlu0 0
      %1392 = vperm.xlu0 %1391, %v1298
      %v1393 = vpop.permute.xlu0 %1392
      %1396 = vset.pattern.permute.xlu0 0
      %1397 = vperm.xlu0 %1396, %v1299
      %v1398 = vpop.permute.xlu0 %1397
      %1401 = vset.pattern.permute.xlu0 0
      %1402 = vperm.xlu0 %1401, %v1300
      %v1403 = vpop.permute.xlu0 %1402
      %1406 = vset.pattern.permute.xlu0 0
      %1407 = vperm.xlu0 %1406, %v1301
      %v1408 = vpop.permute.xlu0 %1407
      %1411 = vset.pattern.permute.xlu0 0
      %1412 = vperm.xlu0 %1411, %v1302
      %v1413 = vpop.permute.xlu0 %1412
      %1416 = vset.pattern.permute.xlu0 0
      %1417 = vperm.xlu0 %1416, %v1303
      %v1418 = vpop.permute.xlu0 %1417
      %1421 = vset.pattern.permute.xlu0 0
      %1422 = vperm.xlu0 %1421, %v1304
      %v1423 = vpop.permute.xlu0 %1422
      %1426 = vset.pattern.permute.xlu0 0
      %1427 = vperm.xlu0 %1426, %v1305
      %v1428 = vpop.permute.xlu0 %1427
      %1431 = vset.pattern.permute.xlu0 0
      %1432 = vperm.xlu0 %1431, %v1306
      %v1433 = vpop.permute.xlu0 %1432
      %1436 = vset.pattern.permute.xlu0 0
      %1437 = vperm.xlu0 %1436, %v1307
      %v1438 = vpop.permute.xlu0 %1437
      %1441 = vset.pattern.permute.xlu0 0
      %1442 = vperm.xlu0 %1441, %v1308
      %v1443 = vpop.permute.xlu0 %1442
      %1446 = vset.pattern.permute.xlu0 0
      %1447 = vperm.xlu0 %1446, %v1309
      %v1448 = vpop.permute.xlu0 %1447
      %1451 = vset.pattern.permute.xlu0 0
      %1452 = vperm.xlu0 %1451, %v1310
      %v1453 = vpop.permute.xlu0 %1452
      %1456 = vset.pattern.permute.xlu0 0
      %1457 = vperm.xlu0 %1456, %v1311
      %v1458 = vpop.permute.xlu0 %1457
      %1461 = vset.pattern.permute.xlu0 0
      %1462 = vperm.xlu0 %1461, %v1312
      %v1463 = vpop.permute.xlu0 %1462
      %1466 = vset.pattern.permute.xlu0 0
      %1467 = vperm.xlu0 %1466, %v1313
      %v1468 = vpop.permute.xlu0 %1467
      %1471 = vset.pattern.permute.xlu0 0
      %1472 = vperm.xlu0 %1471, %v1314
      %v1473 = vpop.permute.xlu0 %1472
      %v1507 = vunpack.c.l.b16 %v1251
      %v1508 = vunpack.c.l.b16 %v1252
      %v1509 = vunpack.c.l.b16 %v1253
      %v1510 = vunpack.c.l.b16 %v1254
      %v1511 = vunpack.c.l.b16 %v1255
      %v1512 = vunpack.c.l.b16 %v1256
      %v1513 = vunpack.c.l.b16 %v1257
      %v1514 = vunpack.c.l.b16 %v1258
      %v1515 = vunpack.c.l.b16 %v1259
      %v1516 = vunpack.c.l.b16 %v1260
      %v1517 = vunpack.c.l.b16 %v1261
      %v1518 = vunpack.c.l.b16 %v1262
      %v1519 = vunpack.c.l.b16 %v1263
      %v1520 = vunpack.c.l.b16 %v1264
      %v1521 = vunpack.c.l.b16 %v1265
      %v1522 = vunpack.c.l.b16 %v1266
      %v1523 = vunpack.c.l.b16 %v1267
      %v1524 = vunpack.c.l.b16 %v1268
      %v1525 = vunpack.c.l.b16 %v1269
      %v1526 = vunpack.c.l.b16 %v1270
      %v1527 = vunpack.c.l.b16 %v1271
      %v1528 = vunpack.c.l.b16 %v1272
      %v1529 = vunpack.c.l.b16 %v1273
      %v1530 = vunpack.c.l.b16 %v1274
      %v1531 = vunpack.c.l.b16 %v1275
      %v1532 = vunpack.c.l.b16 %v1276
      %v1533 = vunpack.c.l.b16 %v1277
      %v1534 = vunpack.c.l.b16 %v1278
      %v1535 = vunpack.c.l.b16 %v1279
      %v1536 = vunpack.c.l.b16 %v1280
      %v1537 = vunpack.c.l.b16 %v1281
      %v1538 = vunpack.c.l.b16 %v1282
      %v1539 = vpack.c.b16 %v1508, %v1507
      %v1540 = vpack.c.b16 %v1510, %v1509
      %v1541 = vpack.c.b16 %v1512, %v1511
      %v1542 = vpack.c.b16 %v1514, %v1513
      %v1543 = vpack.c.b16 %v1516, %v1515
      %v1544 = vpack.c.b16 %v1518, %v1517
      %v1545 = vpack.c.b16 %v1520, %v1519
      %v1546 = vpack.c.b16 %v1522, %v1521
      %v1547 = vpack.c.b16 %v1524, %v1523
      %v1548 = vpack.c.b16 %v1526, %v1525
      %v1549 = vpack.c.b16 %v1528, %v1527
      %v1550 = vpack.c.b16 %v1530, %v1529
      %v1551 = vpack.c.b16 %v1532, %v1531
      %v1552 = vpack.c.b16 %v1534, %v1533
      %v1553 = vpack.c.b16 %v1536, %v1535
      %v1554 = vpack.c.b16 %v1538, %v1537
      %v1587 = vunpack.c.l.b16 %v868
      %v1588 = vunpack.c.l.b16 %v869
      %v1589 = vunpack.c.l.b16 %v870
      %v1590 = vunpack.c.l.b16 %v871
      %v1591 = vunpack.c.l.b16 %v872
      %v1592 = vunpack.c.l.b16 %v873
      %v1593 = vunpack.c.l.b16 %v874
      %v1594 = vunpack.c.l.b16 %v875
      %v1595 = vunpack.c.l.b16 %v876
      %v1596 = vunpack.c.l.b16 %v877
      %v1597 = vunpack.c.l.b16 %v878
      %v1598 = vunpack.c.l.b16 %v879
      %v1599 = vunpack.c.l.b16 %v880
      %v1600 = vunpack.c.l.b16 %v881
      %v1601 = vunpack.c.l.b16 %v882
      %v1602 = vunpack.c.l.b16 %v883
      %v1603 = vpack.c.b16 %v1588, %v1587
      %v1604 = vpack.c.b16 %v1590, %v1589
      %v1605 = vpack.c.b16 %v1592, %v1591
      %v1606 = vpack.c.b16 %v1594, %v1593
      %v1607 = vpack.c.b16 %v1596, %v1595
      %v1608 = vpack.c.b16 %v1598, %v1597
      %v1609 = vpack.c.b16 %v1600, %v1599
      %v1610 = vpack.c.b16 %v1602, %v1601
      %1619 = vmatprep.subr.bf16.mxu0 0
      %1620 = vmatpush1.bf16.msra.mxu0 %v1603
      %1621 = vmatprep.subr.bf16.mxu0 0
      %1622 = vmatpush1.bf16.msra.mxu0 %v1604
      %1623 = vmatprep.subr.bf16.mxu0 0
      %1624 = vmatpush1.bf16.msra.mxu0 %v1605
      %1625 = vmatprep.subr.bf16.mxu0 0
      %1626 = vmatpush1.bf16.msra.mxu0 %v1606
      %1627 = vmatprep.subr.bf16.mxu0 0
      %1628 = vmatpush1.bf16.msra.mxu0 %v1607
      %1629 = vmatprep.subr.bf16.mxu0 0
      %1630 = vmatpush1.bf16.msra.mxu0 %v1608
      %1631 = vmatprep.subr.bf16.mxu0 0
      %1632 = vmatpush1.bf16.msra.mxu0 %v1609
      %1633 = vmatprep.subr.bf16.mxu0 0
      %1634 = vmatpush1.bf16.msra.mxu0 %v1610
      %1635 = vmatprep.subr.bf16.mxu0 0
      %1636 = vmatpush1.bf16.msra.mxu0 0
      %1637 = vmatprep.subr.bf16.mxu0 0
      %1638 = vmatpush1.bf16.msra.mxu0 0
      %1639 = vmatprep.subr.bf16.mxu0 0
      %1640 = vmatpush1.bf16.msra.mxu0 0
      %1641 = vmatprep.subr.bf16.mxu0 0
      %1642 = vmatpush1.bf16.msra.mxu0 0
      %1643 = vmatprep.subr.bf16.mxu0 0
      %1644 = vmatpush1.bf16.msra.mxu0 0
      %1645 = vmatprep.subr.bf16.mxu0 0
      %1646 = vmatpush1.bf16.msra.mxu0 0
      %1647 = vmatprep.subr.bf16.mxu0 0
      %1648 = vmatpush1.bf16.msra.mxu0 0
      %1649 = vmatprep.subr.bf16.mxu0 0
      %1650 = vmatpush1.bf16.msra.mxu0 0
      %1651 = vmatprep.mubr.bf16.mxu0 0
      %1652 = vmatmul.mubr.bf16.gmra.mrb[0].mxu0 %v1539
      %v1653 = vpop.f32.mrb[0].mxu0
      %v1654 = vadd.f32 %v1318, %v1653
      %v1655 = vpop.f32.mrb[0].mxu0
      %v1656 = vpop.f32.mrb[0].mxu0
      %v1657 = vadd.f32 %v1323, %v1656
      %v1658 = vpop.f32.mrb[0].mxu0
      %1659 = vmatprep.mubr.bf16.mxu0 0
      %1660 = vmatmul.mubr.bf16.gmra.mrb[0].mxu0 %v1540
      %v1661 = vpop.f32.mrb[0].mxu0
      %v1662 = vadd.f32 %v1328, %v1661
      %v1663 = vpop.f32.mrb[0].mxu0
      %v1664 = vpop.f32.mrb[0].mxu0
      %v1665 = vadd.f32 %v1333, %v1664
      %v1666 = vpop.f32.mrb[0].mxu0
      %1667 = vmatprep.mubr.bf16.mxu0 0
      %1668 = vmatmul.mubr.bf16.gmra.mrb[0].mxu0 %v1541
      %v1669 = vpop.f32.mrb[0].mxu0
      %v1670 = vadd.f32 %v1338, %v1669
      %v1671 = vpop.f32.mrb[0].mxu0
      %v1672 = vpop.f32.mrb[0].mxu0
      %v1673 = vadd.f32 %v1343, %v1672
      %v1674 = vpop.f32.mrb[0].mxu0
      %1675 = vmatprep.mubr.bf16.mxu0 0
      %1676 = vmatmul.mubr.bf16.gmra.mrb[0].mxu0 %v1542
      %v1677 = vpop.f32.mrb[0].mxu0
      %v1678 = vadd.f32 %v1348, %v1677
      %v1679 = vpop.f32.mrb[0].mxu0
      %v1680 = vpop.f32.mrb[0].mxu0
      %v1681 = vadd.f32 %v1353, %v1680
      %v1682 = vpop.f32.mrb[0].mxu0
      %1683 = vmatprep.mubr.bf16.mxu0 0
      %1684 = vmatmul.mubr.bf16.gmra.mrb[0].mxu0 %v1543
      %v1685 = vpop.f32.mrb[0].mxu0
      %v1686 = vadd.f32 %v1358, %v1685
      %v1687 = vpop.f32.mrb[0].mxu0
      %v1688 = vpop.f32.mrb[0].mxu0
      %v1689 = vadd.f32 %v1363, %v1688
      %v1690 = vpop.f32.mrb[0].mxu0
      %1691 = vmatprep.mubr.bf16.mxu0 0
      %1692 = vmatmul.mubr.bf16.gmra.mrb[0].mxu0 %v1544
      %v1693 = vpop.f32.mrb[0].mxu0
      %v1694 = vadd.f32 %v1368, %v1693
      %v1695 = vpop.f32.mrb[0].mxu0
      %v1696 = vpop.f32.mrb[0].mxu0
      %v1697 = vadd.f32 %v1373, %v1696
      %v1698 = vpop.f32.mrb[0].mxu0
      %1699 = vmatprep.mubr.bf16.mxu0 0
      %1700 = vmatmul.mubr.bf16.gmra.mrb[0].mxu0 %v1545
      %v1701 = vpop.f32.mrb[0].mxu0
      %v1702 = vadd.f32 %v1378, %v1701
      %v1703 = vpop.f32.mrb[0].mxu0
      %v1704 = vpop.f32.mrb[0].mxu0
      %v1705 = vadd.f32 %v1383, %v1704
      %v1706 = vpop.f32.mrb[0].mxu0
      %1707 = vmatprep.mubr.bf16.mxu0 0
      %1708 = vmatmul.mubr.bf16.gmra.mrb[0].mxu0 %v1546
      %v1709 = vpop.f32.mrb[0].mxu0
      %v1710 = vadd.f32 %v1388, %v1709
      %v1711 = vpop.f32.mrb[0].mxu0
      %v1712 = vpop.f32.mrb[0].mxu0
      %v1713 = vadd.f32 %v1393, %v1712
      %v1714 = vpop.f32.mrb[0].mxu0
      %1715 = vmatprep.mubr.bf16.mxu0 0
      %1716 = vmatmul.mubr.bf16.gmra.mrb[0].mxu0 %v1547
      %v1717 = vpop.f32.mrb[0].mxu0
      %v1718 = vadd.f32 %v1398, %v1717
      %v1719 = vpop.f32.mrb[0].mxu0
      %v1720 = vpop.f32.mrb[0].mxu0
      %v1721 = vadd.f32 %v1403, %v1720
      %v1722 = vpop.f32.mrb[0].mxu0
      %1723 = vmatprep.mubr.bf16.mxu0 0
      %1724 = vmatmul.mubr.bf16.gmra.mrb[0].mxu0 %v1548
      %v1725 = vpop.f32.mrb[0].mxu0
      %v1726 = vadd.f32 %v1408, %v1725
      %v1727 = vpop.f32.mrb[0].mxu0
      %v1728 = vpop.f32.mrb[0].mxu0
      %v1729 = vadd.f32 %v1413, %v1728
      %v1730 = vpop.f32.mrb[0].mxu0
      %1731 = vmatprep.mubr.bf16.mxu0 0
      %1732 = vmatmul.mubr.bf16.gmra.mrb[0].mxu0 %v1549
      %v1733 = vpop.f32.mrb[0].mxu0
      %v1734 = vadd.f32 %v1418, %v1733
      %v1735 = vpop.f32.mrb[0].mxu0
      %v1736 = vpop.f32.mrb[0].mxu0
      %v1737 = vadd.f32 %v1423, %v1736
      %v1738 = vpop.f32.mrb[0].mxu0
      %1739 = vmatprep.mubr.bf16.mxu0 0
      %1740 = vmatmul.mubr.bf16.gmra.mrb[0].mxu0 %v1550
      %v1741 = vpop.f32.mrb[0].mxu0
      %v1742 = vadd.f32 %v1428, %v1741
      %v1743 = vpop.f32.mrb[0].mxu0
      %v1744 = vpop.f32.mrb[0].mxu0
      %v1745 = vadd.f32 %v1433, %v1744
      %v1746 = vpop.f32.mrb[0].mxu0
      %1747 = vmatprep.mubr.bf16.mxu0 0
      %1748 = vmatmul.mubr.bf16.gmra.mrb[0].mxu0 %v1551
      %v1749 = vpop.f32.mrb[0].mxu0
      %v1750 = vadd.f32 %v1438, %v1749
      %v1751 = vpop.f32.mrb[0].mxu0
      %v1752 = vpop.f32.mrb[0].mxu0
      %v1753 = vadd.f32 %v1443, %v1752
      %v1754 = vpop.f32.mrb[0].mxu0
      %1755 = vmatprep.mubr.bf16.mxu0 0
      %1756 = vmatmul.mubr.bf16.gmra.mrb[0].mxu0 %v1552
      %v1757 = vpop.f32.mrb[0].mxu0
      %v1758 = vadd.f32 %v1448, %v1757
      %v1759 = vpop.f32.mrb[0].mxu0
      %v1760 = vpop.f32.mrb[0].mxu0
      %v1761 = vadd.f32 %v1453, %v1760
      %v1762 = vpop.f32.mrb[0].mxu0
      %1763 = vmatprep.mubr.bf16.mxu0 0
      %1764 = vmatmul.mubr.bf16.gmra.mrb[0].mxu0 %v1553
      %v1765 = vpop.f32.mrb[0].mxu0
      %v1766 = vadd.f32 %v1458, %v1765
      %v1767 = vpop.f32.mrb[0].mxu0
      %v1768 = vpop.f32.mrb[0].mxu0
      %v1769 = vadd.f32 %v1463, %v1768
      %v1770 = vpop.f32.mrb[0].mxu0
      %1771 = vmatprep.mubr.bf16.mxu0 0
      %1772 = vmatmul.mubr.bf16.gmra.mrb[0].mxu0 %v1554
      %v1773 = vpop.f32.mrb[0].mxu0
      %v1774 = vadd.f32 %v1468, %v1773
      %v1775 = vpop.f32.mrb[0].mxu0
      %v1776 = vpop.f32.mrb[0].mxu0
      %v1777 = vadd.f32 %v1473, %v1776
      %v1778 = vpop.f32.mrb[0].mxu0
      %1779 = vdwg.mxu0
      %vm1780 = vcmp.ge.f32.partialorder %v1654, 0.0
      %vm1781 = vcmp.ge.f32.partialorder %v1657, 0.0
      %vm1782 = vcmp.ge.f32.partialorder %v1662, 0.0
      %vm1783 = vcmp.ge.f32.partialorder %v1665, 0.0
      %vm1784 = vcmp.ge.f32.partialorder %v1670, 0.0
      %vm1785 = vcmp.ge.f32.partialorder %v1673, 0.0
      %vm1786 = vcmp.ge.f32.partialorder %v1678, 0.0
      %vm1787 = vcmp.ge.f32.partialorder %v1681, 0.0
      %vm1788 = vcmp.ge.f32.partialorder %v1686, 0.0
      %vm1789 = vcmp.ge.f32.partialorder %v1689, 0.0
      %vm1790 = vcmp.ge.f32.partialorder %v1694, 0.0
      %vm1791 = vcmp.ge.f32.partialorder %v1697, 0.0
      %vm1792 = vcmp.ge.f32.partialorder %v1702, 0.0
      %vm1793 = vcmp.ge.f32.partialorder %v1705, 0.0
      %vm1794 = vcmp.ge.f32.partialorder %v1710, 0.0
      %vm1795 = vcmp.ge.f32.partialorder %v1713, 0.0
      %vm1796 = vcmp.ge.f32.partialorder %v1718, 0.0
      %vm1797 = vcmp.ge.f32.partialorder %v1721, 0.0
      %vm1798 = vcmp.ge.f32.partialorder %v1726, 0.0
      %vm1799 = vcmp.ge.f32.partialorder %v1729, 0.0
      %vm1800 = vcmp.ge.f32.partialorder %v1734, 0.0
      %vm1801 = vcmp.ge.f32.partialorder %v1737, 0.0
      %vm1802 = vcmp.ge.f32.partialorder %v1742, 0.0
      %vm1803 = vcmp.ge.f32.partialorder %v1745, 0.0
      %vm1804 = vcmp.ge.f32.partialorder %v1750, 0.0
      %vm1805 = vcmp.ge.f32.partialorder %v1753, 0.0
      %vm1806 = vcmp.ge.f32.partialorder %v1758, 0.0
      %vm1807 = vcmp.ge.f32.partialorder %v1761, 0.0
      %vm1808 = vcmp.ge.f32.partialorder %v1766, 0.0
      %vm1809 = vcmp.ge.f32.partialorder %v1769, 0.0
      %vm1810 = vcmp.ge.f32.partialorder %v1774, 0.0
      %vm1811 = vcmp.ge.f32.partialorder %v1777, 0.0
      %v1812 = vmul.f32 %v1654, 0.2
      %v1813 = vmul.f32 %v1657, 0.2
      %v1814 = vmul.f32 %v1662, 0.2
      %v1815 = vmul.f32 %v1665, 0.2
      %v1816 = vmul.f32 %v1670, 0.2
      %v1817 = vmul.f32 %v1673, 0.2
      %v1818 = vmul.f32 %v1678, 0.2
      %v1819 = vmul.f32 %v1681, 0.2
      %v1820 = vmul.f32 %v1686, 0.2
      %v1821 = vmul.f32 %v1689, 0.2
      %v1822 = vmul.f32 %v1694, 0.2
      %v1823 = vmul.f32 %v1697, 0.2
      %v1824 = vmul.f32 %v1702, 0.2
      %v1825 = vmul.f32 %v1705, 0.2
      %v1826 = vmul.f32 %v1710, 0.2
      %v1827 = vmul.f32 %v1713, 0.2
      %v1828 = vmul.f32 %v1718, 0.2
      %v1829 = vmul.f32 %v1721, 0.2
      %v1830 = vmul.f32 %v1726, 0.2
      %v1831 = vmul.f32 %v1729, 0.2
      %v1832 = vmul.f32 %v1734, 0.2
      %v1833 = vmul.f32 %v1737, 0.2
      %v1834 = vmul.f32 %v1742, 0.2
      %v1835 = vmul.f32 %v1745, 0.2
      %v1836 = vmul.f32 %v1750, 0.2
      %v1837 = vmul.f32 %v1753, 0.2
      %v1838 = vmul.f32 %v1758, 0.2
      %v1839 = vmul.f32 %v1761, 0.2
      %v1840 = vmul.f32 %v1766, 0.2
      %v1841 = vmul.f32 %v1769, 0.2
      %v1842 = vmul.f32 %v1774, 0.2
      %v1843 = vmul.f32 %v1777, 0.2
      %v1844 = vsel %vm1780, %v1654, %v1812
      %v1845 = vsel %vm1781, %v1657, %v1813
      %v1846 = vsel %vm1782, %v1662, %v1814
      %v1847 = vsel %vm1783, %v1665, %v1815
      %v1848 = vsel %vm1784, %v1670, %v1816
      %v1849 = vsel %vm1785, %v1673, %v1817
      %v1850 = vsel %vm1786, %v1678, %v1818
      %v1851 = vsel %vm1787, %v1681, %v1819
      %v1852 = vsel %vm1788, %v1686, %v1820
      %v1853 = vsel %vm1789, %v1689, %v1821
      %v1854 = vsel %vm1790, %v1694, %v1822
      %v1855 = vsel %vm1791, %v1697, %v1823
      %v1856 = vsel %vm1792, %v1702, %v1824
      %v1857 = vsel %vm1793, %v1705, %v1825
      %v1858 = vsel %vm1794, %v1710, %v1826
      %v1859 = vsel %vm1795, %v1713, %v1827
      %v1860 = vsel %vm1796, %v1718, %v1828
      %v1861 = vsel %vm1797, %v1721, %v1829
      %v1862 = vsel %vm1798, %v1726, %v1830
      %v1863 = vsel %vm1799, %v1729, %v1831
      %v1864 = vsel %vm1800, %v1734, %v1832
      %v1865 = vsel %vm1801, %v1737, %v1833
      %v1866 = vsel %vm1802, %v1742, %v1834
      %v1867 = vsel %vm1803, %v1745, %v1835
      %v1868 = vsel %vm1804, %v1750, %v1836
      %v1869 = vsel %vm1805, %v1753, %v1837
      %v1870 = vsel %vm1806, %v1758, %v1838
      %v1871 = vsel %vm1807, %v1761, %v1839
      %v1872 = vsel %vm1808, %v1766, %v1840
      %v1873 = vsel %vm1809, %v1769, %v1841
      %v1874 = vsel %vm1810, %v1774, %v1842
      %v1875 = vsel %vm1811, %v1777, %v1843
      %v1876 = vld [vmem:[%s10] sm:$0xff]
      %v1877 = vld [vmem:[%s10 + $0x8] sm:$0xff]
      %v1878 = vld [vmem:[%s10 + $0x10] sm:$0xff]
      %v1879 = vld [vmem:[%s10 + $0x18] sm:$0xff]
      %v1880 = vld [vmem:[%s10 + $0x20] sm:$0xff]
      %v1881 = vld [vmem:[%s10 + $0x28] sm:$0xff]
      %v1882 = vld [vmem:[%s10 + $0x30] sm:$0xff]
      %v1883 = vld [vmem:[%s10 + $0x38] sm:$0xff]
      %v1884 = vpack.c.bf16 %v1845, %v1844
      %v1885 = vpack.c.bf16 %v1847, %v1846
      %v1886 = vpack.c.bf16 %v1849, %v1848
      %v1887 = vpack.c.bf16 %v1851, %v1850
      %v1888 = vpack.c.bf16 %v1853, %v1852
      %v1889 = vpack.c.bf16 %v1855, %v1854
      %v1890 = vpack.c.bf16 %v1857, %v1856
      %v1891 = vpack.c.bf16 %v1859, %v1858
      %v1892 = vpack.c.bf16 %v1861, %v1860
      %v1893 = vpack.c.bf16 %v1863, %v1862
      %v1894 = vpack.c.bf16 %v1865, %v1864
      %v1895 = vpack.c.bf16 %v1867, %v1866
      %v1896 = vpack.c.bf16 %v1869, %v1868
      %v1897 = vpack.c.bf16 %v1871, %v1870
      %v1898 = vpack.c.bf16 %v1873, %v1872
      %v1899 = vpack.c.bf16 %v1875, %v1874
      %v1908 = vunpack.c.l.b16 %v1876
      %v1909 = vunpack.c.h.b16 %v1876
      %v1910 = vunpack.c.l.b16 %v1877
      %v1911 = vunpack.c.h.b16 %v1877
      %v1912 = vunpack.c.l.b16 %v1878
      %v1913 = vunpack.c.h.b16 %v1878
      %v1914 = vunpack.c.l.b16 %v1879
      %v1915 = vunpack.c.h.b16 %v1879
      %v1916 = vunpack.c.l.b16 %v1880
      %v1917 = vunpack.c.h.b16 %v1880
      %v1918 = vunpack.c.l.b16 %v1881
      %v1919 = vunpack.c.h.b16 %v1881
      %v1920 = vunpack.c.l.b16 %v1882
      %v1921 = vunpack.c.h.b16 %v1882
      %v1922 = vunpack.c.l.b16 %v1883
      %v1923 = vunpack.c.h.b16 %v1883
      %v1924 = vpack.c.b16 %v1910, %v1908
      %v1925 = vpack.c.b16 %v1911, %v1909
      %v1926 = vpack.c.b16 %v1914, %v1912
      %v1927 = vpack.c.b16 %v1915, %v1913
      %v1928 = vpack.c.b16 %v1918, %v1916
      %v1929 = vpack.c.b16 %v1919, %v1917
      %v1930 = vpack.c.b16 %v1922, %v1920
      %v1931 = vpack.c.b16 %v1923, %v1921
      %1940 = vmatprep.subr.bf16.mxu0 0
      %1941 = vmatpush1.bf16.msra.mxu0 %v1884
      %1942 = vmatprep.subr.bf16.mxu0 0
      %1943 = vmatpush1.bf16.msra.mxu0 %v1885
      %1944 = vmatprep.subr.bf16.mxu0 0
      %1945 = vmatpush1.bf16.msra.mxu0 %v1886
      %1946 = vmatprep.subr.bf16.mxu0 0
      %1947 = vmatpush1.bf16.msra.mxu0 %v1887
      %1948 = vmatprep.subr.bf16.mxu0 0
      %1949 = vmatpush1.bf16.msra.mxu0 %v1888
      %1950 = vmatprep.subr.bf16.mxu0 0
      %1951 = vmatpush1.bf16.msra.mxu0 %v1889
      %1952 = vmatprep.subr.bf16.mxu0 0
      %1953 = vmatpush1.bf16.msra.mxu0 %v1890
      %1954 = vmatprep.subr.bf16.mxu0 0
      %1955 = vmatpush1.bf16.msra.mxu0 %v1891
      %1956 = vmatprep.subr.bf16.mxu0 0
      %1957 = vmatpush1.bf16.msra.mxu0 %v1892
      %1958 = vmatprep.subr.bf16.mxu0 0
      %1959 = vmatpush1.bf16.msra.mxu0 %v1893
      %1960 = vmatprep.subr.bf16.mxu0 0
      %1961 = vmatpush1.bf16.msra.mxu0 %v1894
      %1962 = vmatprep.subr.bf16.mxu0 0
      %1963 = vmatpush1.bf16.msra.mxu0 %v1895
      %1964 = vmatprep.subr.bf16.mxu0 0
      %1965 = vmatpush1.bf16.msra.mxu0 %v1896
      %1966 = vmatprep.subr.bf16.mxu0 0
      %1967 = vmatpush1.bf16.msra.mxu0 %v1897
      %1968 = vmatprep.subr.bf16.mxu0 0
      %1969 = vmatpush1.bf16.msra.mxu0 %v1898
      %1970 = vmatprep.subr.bf16.mxu0 0
      %1971 = vmatpush1.bf16.msra.mxu0 %v1899
      %1972 = vmatprep.mubr.bf16.mxu0 %v1925
      %1973 = vmatmul.mubr.bf16.gmra.mrb[0].mxu0 %v1924
      %v1974 = vpop.f32.mrb[0].mxu0
      %v1975 = vadd.f32 %v1221, %v1974
      %v1976 = vpop.f32.mrb[0].mxu0
      %v1977 = vpop.f32.mrb[0].mxu0
      %v1978 = vadd.f32 %v1224, %v1977
      %v1979 = vpop.f32.mrb[0].mxu0
      %1980 = vmatprep.mubr.bf16.mxu0 %v1927
      %1981 = vmatmul.mubr.bf16.gmra.mrb[0].mxu0 %v1926
      %v1982 = vpop.f32.mrb[0].mxu0
      %v1983 = vadd.f32 %v1229, %v1982
      %v1984 = vpop.f32.mrb[0].mxu0
      %v1985 = vpop.f32.mrb[0].mxu0
      %v1986 = vadd.f32 %v1232, %v1985
      %v1987 = vpop.f32.mrb[0].mxu0
      %1988 = vmatprep.mubr.bf16.mxu0 %v1929
      %1989 = vmatmul.mubr.bf16.gmra.mrb[0].mxu0 %v1928
      %v1990 = vpop.f32.mrb[0].mxu0
      %v1991 = vadd.f32 %v1237, %v1990
      %v1992 = vpop.f32.mrb[0].mxu0
      %v1993 = vpop.f32.mrb[0].mxu0
      %v1994 = vadd.f32 %v1240, %v1993
      %v1995 = vpop.f32.mrb[0].mxu0
      %1996 = vmatprep.mubr.bf16.mxu0 %v1931
      %1997 = vmatmul.mubr.bf16.gmra.mrb[0].mxu0 %v1930
      %v1998 = vpop.f32.mrb[0].mxu0
      %v1999 = vadd.f32 %v1245, %v1998
      %v2000 = vpop.f32.mrb[0].mxu0
      %v2001 = vpop.f32.mrb[0].mxu0
      %v2002 = vadd.f32 %v1248, %v2001
      %v2003 = vpop.f32.mrb[0].mxu0
      %2004 = vdwg.mxu0
      %v2005 = vld [vmem:[%s11] sm:$0xff]
      %v2006 = vld [vmem:[%s11 + $0x8] sm:$0xff]
      %v2007 = vld [vmem:[%s11 + $0x10] sm:$0xff]
      %v2008 = vld [vmem:[%s11 + $0x18] sm:$0xff]
      %v2009 = vld [vmem:[%s11 + $0x20] sm:$0xff]
      %v2010 = vld [vmem:[%s11 + $0x28] sm:$0xff]
      %v2011 = vld [vmem:[%s11 + $0x30] sm:$0xff]
      %v2012 = vld [vmem:[%s11 + $0x38] sm:$0xff]
      %2014 = vset.pattern.permute.xlu0 0
      %2015 = vperm.xlu0 %2014, %v2005
      %v2016 = vpop.permute.xlu0 %2015
      %2019 = vset.pattern.permute.xlu0 0
      %2020 = vperm.xlu0 %2019, %v2006
      %v2021 = vpop.permute.xlu0 %2020
      %2024 = vset.pattern.permute.xlu0 0
      %2025 = vperm.xlu0 %2024, %v2007
      %v2026 = vpop.permute.xlu0 %2025
      %2029 = vset.pattern.permute.xlu0 0
      %2030 = vperm.xlu0 %2029, %v2008
      %v2031 = vpop.permute.xlu0 %2030
      %2034 = vset.pattern.permute.xlu0 0
      %2035 = vperm.xlu0 %2034, %v2009
      %v2036 = vpop.permute.xlu0 %2035
      %2039 = vset.pattern.permute.xlu0 0
      %2040 = vperm.xlu0 %2039, %v2010
      %v2041 = vpop.permute.xlu0 %2040
      %2044 = vset.pattern.permute.xlu0 0
      %2045 = vperm.xlu0 %2044, %v2011
      %v2046 = vpop.permute.xlu0 %2045
      %2049 = vset.pattern.permute.xlu0 0
      %2050 = vperm.xlu0 %2049, %v2012
      %v2051 = vpop.permute.xlu0 %2050
      %v2053 = vadd.f32 %v1975, %v2016
      %v2054 = vadd.f32 %v1978, %v2021
      %v2055 = vadd.f32 %v1983, %v2026
      %v2056 = vadd.f32 %v1986, %v2031
      %v2057 = vadd.f32 %v1991, %v2036
      %v2058 = vadd.f32 %v1994, %v2041
      %v2059 = vadd.f32 %v1999, %v2046
      %v2060 = vadd.f32 %v2002, %v2051
      %vm2061 = vcmp.ge.f32.partialorder %v2053, 0.0
      %vm2062 = vcmp.ge.f32.partialorder %v2054, 0.0
      %vm2063 = vcmp.ge.f32.partialorder %v2055, 0.0
      %vm2064 = vcmp.ge.f32.partialorder %v2056, 0.0
      %vm2065 = vcmp.ge.f32.partialorder %v2057, 0.0
      %vm2066 = vcmp.ge.f32.partialorder %v2058, 0.0
      %vm2067 = vcmp.ge.f32.partialorder %v2059, 0.0
      %vm2068 = vcmp.ge.f32.partialorder %v2060, 0.0
      %v2069 = vmul.f32 %v2053, 0.2
      %v2070 = vmul.f32 %v2054, 0.2
      %v2071 = vmul.f32 %v2055, 0.2
      %v2072 = vmul.f32 %v2056, 0.2
      %v2073 = vmul.f32 %v2057, 0.2
      %v2074 = vmul.f32 %v2058, 0.2
      %v2075 = vmul.f32 %v2059, 0.2
      %v2076 = vmul.f32 %v2060, 0.2
      %v2077 = vsel %vm2061, %v2053, %v2069
      %v2078 = vsel %vm2062, %v2054, %v2070
      %v2079 = vsel %vm2063, %v2055, %v2071
      %v2080 = vsel %vm2064, %v2056, %v2072
      %v2081 = vsel %vm2065, %v2057, %v2073
      %v2082 = vsel %vm2066, %v2058, %v2074
      %v2083 = vsel %vm2067, %v2059, %v2075
      %v2084 = vsel %vm2068, %v2060, %v2076
      %v2085 = vld [vmem:[%s13] sm:$0xf]
      %v2086 = vld [vmem:[%s13 + $0x4] sm:$0xf]
      %v2087 = vld [vmem:[%s13 + $0x8] sm:$0xf]
      %v2088 = vld [vmem:[%s13 + $0xc] sm:$0xf]
      %v2089 = vld [vmem:[%s13 + $0x10] sm:$0xf]
      %v2090 = vld [vmem:[%s13 + $0x14] sm:$0xf]
      %v2091 = vld [vmem:[%s13 + $0x18] sm:$0xf]
      %v2092 = vld [vmem:[%s13 + $0x1c] sm:$0xf]
      %v2093 = vpack.c.bf16 %v2078, %v2077
      %v2094 = vpack.c.bf16 %v2080, %v2079
      %v2095 = vpack.c.bf16 %v2082, %v2081
      %v2096 = vpack.c.bf16 %v2084, %v2083
      %v2105 = vunpack.c.l.b16 %v2085
      %v2106 = vunpack.c.l.b16 %v2086
      %v2107 = vunpack.c.l.b16 %v2087
      %v2108 = vunpack.c.l.b16 %v2088
      %v2109 = vunpack.c.l.b16 %v2089
      %v2110 = vunpack.c.l.b16 %v2090
      %v2111 = vunpack.c.l.b16 %v2091
      %v2112 = vunpack.c.l.b16 %v2092
      %v2113 = vpack.c.b16 %v2106, %v2105
      %v2114 = vpack.c.b16 %v2108, %v2107
      %v2115 = vpack.c.b16 %v2110, %v2109
      %v2116 = vpack.c.b16 %v2112, %v2111
      %v2118 = vsel %vm734, %v2113, 0
      %v2121 = vsel %vm734, %v2114, 0
      %v2124 = vsel %vm734, %v2115, 0
      %v2127 = vsel %vm734, %v2116, 0
      %2129 = vmatprep.subr.bf16.mxu0 0
      %2130 = vmatpush1.bf16.msra.mxu0 %v2093
      %2131 = vmatprep.subr.bf16.mxu0 0
      %2132 = vmatpush1.bf16.msra.mxu0 %v2094
      %2133 = vmatprep.subr.bf16.mxu0 0
      %2134 = vmatpush1.bf16.msra.mxu0 %v2095
      %2135 = vmatprep.subr.bf16.mxu0 0
      %2136 = vmatpush1.bf16.msra.mxu0 %v2096
      %2137 = vmatprep.subr.bf16.mxu0 0
      %2138 = vmatpush1.bf16.msra.mxu0 0
      %2139 = vmatprep.subr.bf16.mxu0 0
      %2140 = vmatpush1.bf16.msra.mxu0 0
      %2141 = vmatprep.subr.bf16.mxu0 0
      %2142 = vmatpush1.bf16.msra.mxu0 0
      %2143 = vmatprep.subr.bf16.mxu0 0
      %2144 = vmatpush1.bf16.msra.mxu0 0
      %2145 = vmatprep.subr.bf16.mxu0 0
      %2146 = vmatpush1.bf16.msra.mxu0 0
      %2147 = vmatprep.subr.bf16.mxu0 0
      %2148 = vmatpush1.bf16.msra.mxu0 0
      %2149 = vmatprep.subr.bf16.mxu0 0
      %2150 = vmatpush1.bf16.msra.mxu0 0
      %2151 = vmatprep.subr.bf16.mxu0 0
      %2152 = vmatpush1.bf16.msra.mxu0 0
      %2153 = vmatprep.subr.bf16.mxu0 0
      %2154 = vmatpush1.bf16.msra.mxu0 0
      %2155 = vmatprep.subr.bf16.mxu0 0
      %2156 = vmatpush1.bf16.msra.mxu0 0
      %2157 = vmatprep.subr.bf16.mxu0 0
      %2158 = vmatpush1.bf16.msra.mxu0 0
      %2159 = vmatprep.subr.bf16.mxu0 0
      %2160 = vmatpush1.bf16.msra.mxu0 0
      %2161 = vmatprep.mubr.bf16.mxu0 0
      %2162 = vmatmul.mubr.bf16.gmra.mrb[0].mxu0 %v2118
      %v2163 = vpop.f32.mrb[0].mxu0
      %v2164 = vadd.f32 0.0, %v2163
      %v2165 = vpop.f32.mrb[0].mxu0
      %v2166 = vpop.f32.mrb[0].mxu0
      %v2167 = vadd.f32 0.0, %v2166
      %v2168 = vpop.f32.mrb[0].mxu0
      %2169 = vmatprep.mubr.bf16.mxu0 0
      %2170 = vmatmul.mubr.bf16.gmra.mrb[0].mxu0 %v2121
      %v2171 = vpop.f32.mrb[0].mxu0
      %v2172 = vadd.f32 0.0, %v2171
      %v2173 = vpop.f32.mrb[0].mxu0
      %v2174 = vpop.f32.mrb[0].mxu0
      %v2175 = vadd.f32 0.0, %v2174
      %v2176 = vpop.f32.mrb[0].mxu0
      %2177 = vmatprep.mubr.bf16.mxu0 0
      %2178 = vmatmul.mubr.bf16.gmra.mrb[0].mxu0 %v2124
      %v2179 = vpop.f32.mrb[0].mxu0
      %v2180 = vadd.f32 0.0, %v2179
      %v2181 = vpop.f32.mrb[0].mxu0
      %v2182 = vpop.f32.mrb[0].mxu0
      %v2183 = vadd.f32 0.0, %v2182
      %v2184 = vpop.f32.mrb[0].mxu0
      %2185 = vmatprep.mubr.bf16.mxu0 0
      %2186 = vmatmul.mubr.bf16.gmra.mrb[0].mxu0 %v2127
      %v2187 = vpop.f32.mrb[0].mxu0
      %v2188 = vadd.f32 0.0, %v2187
      %v2189 = vpop.f32.mrb[0].mxu0
      %v2190 = vpop.f32.mrb[0].mxu0
      %v2191 = vadd.f32 0.0, %v2190
      %v2192 = vpop.f32.mrb[0].mxu0
      %2193 = vdwg.mxu0
      %v2194 = vpack.c.bf16 %v2167, %v2164
      %v2195 = vpack.c.bf16 %v2175, %v2172
      %v2196 = vpack.c.bf16 %v2183, %v2180
      %v2197 = vpack.c.bf16 %v2191, %v2188
      %v2198 = vld [vmem:[%s2] sm:$0xff]
      %v2199 = vld [vmem:[%s2 + $0x8] sm:$0xff]
      %v2200 = vld [vmem:[%s2 + $0x10] sm:$0xff]
      %v2201 = vld [vmem:[%s2 + $0x18] sm:$0xff]
      %v2202 = vld [vmem:[%s2 + $0x20] sm:$0xff]
      %v2203 = vld [vmem:[%s2 + $0x28] sm:$0xff]
      %v2204 = vld [vmem:[%s2 + $0x30] sm:$0xff]
      %v2205 = vld [vmem:[%s2 + $0x38] sm:$0xff]
      %v2214 = vunpack.c.l.b16 %v2198
      %v2215 = vunpack.c.h.b16 %v2198
      %v2216 = vunpack.c.l.b16 %v2199
      %v2217 = vunpack.c.h.b16 %v2199
      %v2218 = vunpack.c.l.b16 %v2200
      %v2219 = vunpack.c.h.b16 %v2200
      %v2220 = vunpack.c.l.b16 %v2201
      %v2221 = vunpack.c.h.b16 %v2201
      %v2222 = vunpack.c.l.b16 %v2202
      %v2223 = vunpack.c.h.b16 %v2202
      %v2224 = vunpack.c.l.b16 %v2203
      %v2225 = vunpack.c.h.b16 %v2203
      %v2226 = vunpack.c.l.b16 %v2204
      %v2227 = vunpack.c.h.b16 %v2204
      %v2228 = vunpack.c.l.b16 %v2205
      %v2229 = vunpack.c.h.b16 %v2205
      %v2230 = vpack.c.b16 %v2216, %v2214
      %v2231 = vpack.c.b16 %v2217, %v2215
      %v2232 = vpack.c.b16 %v2220, %v2218
      %v2233 = vpack.c.b16 %v2221, %v2219
      %v2234 = vpack.c.b16 %v2224, %v2222
      %v2235 = vpack.c.b16 %v2225, %v2223
      %v2236 = vpack.c.b16 %v2228, %v2226
      %v2237 = vpack.c.b16 %v2229, %v2227
      %v2247 = vsel %vm734, %v2194, 0
      %v2250 = vsel %vm734, %v2195, 0
      %v2253 = vsel %vm734, %v2196, 0
      %v2256 = vsel %vm734, %v2197, 0
      %2258 = vmatprep.subr.bf16.mxu0 %v2231
      %2259 = vmatpush1.bf16.msra.mxu0 %v2230
      %2260 = vmatprep.subr.bf16.mxu0 %v2233
      %2261 = vmatpush1.bf16.msra.mxu0 %v2232
      %2262 = vmatprep.subr.bf16.mxu0 %v2235
      %2263 = vmatpush1.bf16.msra.mxu0 %v2234
      %2264 = vmatprep.subr.bf16.mxu0 %v2237
      %2265 = vmatpush1.bf16.msra.mxu0 %v2236
      %2266 = vmatprep.subr.bf16.mxu0 0
      %2267 = vmatpush1.bf16.msra.mxu0 0
      %2268 = vmatprep.subr.bf16.mxu0 0
      %2269 = vmatpush1.bf16.msra.mxu0 0
      %2270 = vmatprep.subr.bf16.mxu0 0
      %2271 = vmatpush1.bf16.msra.mxu0 0
      %2272 = vmatprep.subr.bf16.mxu0 0
      %2273 = vmatpush1.bf16.msra.mxu0 0
      %2274 = vmatprep.subr.bf16.mxu0 0
      %2275 = vmatpush1.bf16.msra.mxu0 0
      %2276 = vmatprep.subr.bf16.mxu0 0
      %2277 = vmatpush1.bf16.msra.mxu0 0
      %2278 = vmatprep.subr.bf16.mxu0 0
      %2279 = vmatpush1.bf16.msra.mxu0 0
      %2280 = vmatprep.subr.bf16.mxu0 0
      %2281 = vmatpush1.bf16.msra.mxu0 0
      %2282 = vmatprep.subr.bf16.mxu0 0
      %2283 = vmatpush1.bf16.msra.mxu0 0
      %2284 = vmatprep.subr.bf16.mxu0 0
      %2285 = vmatpush1.bf16.msra.mxu0 0
      %2286 = vmatprep.subr.bf16.mxu0 0
      %2287 = vmatpush1.bf16.msra.mxu0 0
      %2288 = vmatprep.subr.bf16.mxu0 0
      %2289 = vmatpush1.bf16.msra.mxu0 0
      %2290 = vmatprep.mubr.bf16.mxu0 0
      %2291 = vmatmul.mubr.bf16.gmra.mrb[0].mxu0 %v2247
      %v2292 = vpop.f32.mrb[0].mxu0
      %v2293 = vadd.f32 0.0, %v2292
      %v2294 = vpop.f32.mrb[0].mxu0
      %v2295 = vadd.f32 0.0, %v2294
      %v2296 = vpop.f32.mrb[0].mxu0
      %v2297 = vadd.f32 0.0, %v2296
      %v2298 = vpop.f32.mrb[0].mxu0
      %v2299 = vadd.f32 0.0, %v2298
      %2300 = vmatprep.mubr.bf16.mxu0 0
      %2301 = vmatmul.mubr.bf16.gmra.mrb[0].mxu0 %v2250
      %v2302 = vpop.f32.mrb[0].mxu0
      %v2303 = vadd.f32 0.0, %v2302
      %v2304 = vpop.f32.mrb[0].mxu0
      %v2305 = vadd.f32 0.0, %v2304
      %v2306 = vpop.f32.mrb[0].mxu0
      %v2307 = vadd.f32 0.0, %v2306
      %v2308 = vpop.f32.mrb[0].mxu0
      %v2309 = vadd.f32 0.0, %v2308
      %2310 = vmatprep.mubr.bf16.mxu0 0
      %2311 = vmatmul.mubr.bf16.gmra.mrb[0].mxu0 %v2253
      %v2312 = vpop.f32.mrb[0].mxu0
      %v2313 = vadd.f32 0.0, %v2312
      %v2314 = vpop.f32.mrb[0].mxu0
      %v2315 = vadd.f32 0.0, %v2314
      %v2316 = vpop.f32.mrb[0].mxu0
      %v2317 = vadd.f32 0.0, %v2316
      %v2318 = vpop.f32.mrb[0].mxu0
      %v2319 = vadd.f32 0.0, %v2318
      %2320 = vmatprep.mubr.bf16.mxu0 0
      %2321 = vmatmul.mubr.bf16.gmra.mrb[0].mxu0 %v2256
      %v2322 = vpop.f32.mrb[0].mxu0
      %v2323 = vadd.f32 0.0, %v2322
      %v2324 = vpop.f32.mrb[0].mxu0
      %v2325 = vadd.f32 0.0, %v2324
      %v2326 = vpop.f32.mrb[0].mxu0
      %v2327 = vadd.f32 0.0, %v2326
      %v2328 = vpop.f32.mrb[0].mxu0
      %v2329 = vadd.f32 0.0, %v2328
      %2330 = vdwg.mxu0
      %v2331 = vld [vmem:[%s12] sm:$0xf]
      %v2332 = vld [vmem:[%s12 + $0x4] sm:$0xf]
      %v2333 = vld [vmem:[%s12 + $0x8] sm:$0xf]
      %v2334 = vld [vmem:[%s12 + $0xc] sm:$0xf]
      %v2335 = vld [vmem:[%s12 + $0x10] sm:$0xf]
      %v2336 = vld [vmem:[%s12 + $0x14] sm:$0xf]
      %v2337 = vld [vmem:[%s12 + $0x18] sm:$0xf]
      %v2338 = vld [vmem:[%s12 + $0x1c] sm:$0xf]
      %v2339 = vpack.c.bf16 %v854, %v852
      %v2340 = vpack.c.bf16 %v855, %v853
      %v2341 = vpack.c.bf16 %v858, %v856
      %v2342 = vpack.c.bf16 %v859, %v857
      %v2343 = vpack.c.bf16 %v862, %v860
      %v2344 = vpack.c.bf16 %v863, %v861
      %v2345 = vpack.c.bf16 %v866, %v864
      %v2346 = vpack.c.bf16 %v867, %v865
      %v2355 = vunpack.c.l.b16 %v2331
      %v2356 = vunpack.c.l.b16 %v2332
      %v2357 = vunpack.c.l.b16 %v2333
      %v2358 = vunpack.c.l.b16 %v2334
      %v2359 = vunpack.c.l.b16 %v2335
      %v2360 = vunpack.c.l.b16 %v2336
      %v2361 = vunpack.c.l.b16 %v2337
      %v2362 = vunpack.c.l.b16 %v2338
      %v2363 = vpack.c.b16 %v2356, %v2355
      %v2364 = vpack.c.b16 %v2358, %v2357
      %v2365 = vpack.c.b16 %v2360, %v2359
      %v2366 = vpack.c.b16 %v2362, %v2361
      %v2368 = vsel %vm734, %v2363, 0
      %v2371 = vsel %vm734, %v2364, 0
      %v2374 = vsel %vm734, %v2365, 0
      %v2377 = vsel %vm734, %v2366, 0
      %2379 = vmatprep.subr.bf16.mxu0 %v2340
      %2380 = vmatpush1.bf16.msra.mxu0 %v2339
      %2381 = vmatprep.subr.bf16.mxu0 %v2342
      %2382 = vmatpush1.bf16.msra.mxu0 %v2341
      %2383 = vmatprep.subr.bf16.mxu0 %v2344
      %2384 = vmatpush1.bf16.msra.mxu0 %v2343
      %2385 = vmatprep.subr.bf16.mxu0 %v2346
      %2386 = vmatpush1.bf16.msra.mxu0 %v2345
      %2387 = vmatprep.subr.bf16.mxu0 0
      %2388 = vmatpush1.bf16.msra.mxu0 0
      %2389 = vmatprep.subr.bf16.mxu0 0
      %2390 = vmatpush1.bf16.msra.mxu0 0
      %2391 = vmatprep.subr.bf16.mxu0 0
      %2392 = vmatpush1.bf16.msra.mxu0 0
      %2393 = vmatprep.subr.bf16.mxu0 0
      %2394 = vmatpush1.bf16.msra.mxu0 0
      %2395 = vmatprep.subr.bf16.mxu0 0
      %2396 = vmatpush1.bf16.msra.mxu0 0
      %2397 = vmatprep.subr.bf16.mxu0 0
      %2398 = vmatpush1.bf16.msra.mxu0 0
      %2399 = vmatprep.subr.bf16.mxu0 0
      %2400 = vmatpush1.bf16.msra.mxu0 0
      %2401 = vmatprep.subr.bf16.mxu0 0
      %2402 = vmatpush1.bf16.msra.mxu0 0
      %2403 = vmatprep.subr.bf16.mxu0 0
      %2404 = vmatpush1.bf16.msra.mxu0 0
      %2405 = vmatprep.subr.bf16.mxu0 0
      %2406 = vmatpush1.bf16.msra.mxu0 0
      %2407 = vmatprep.subr.bf16.mxu0 0
      %2408 = vmatpush1.bf16.msra.mxu0 0
      %2409 = vmatprep.subr.bf16.mxu0 0
      %2410 = vmatpush1.bf16.msra.mxu0 0
      %2411 = vmatprep.mubr.bf16.mxu0 0
      %2412 = vmatmul.mubr.bf16.gmra.mrb[0].mxu0 %v2368
      %v2413 = vpop.f32.mrb[0].mxu0
      %v2414 = vadd.f32 %v2293, %v2413
      %v2415 = vpop.f32.mrb[0].mxu0
      %v2416 = vadd.f32 %v2295, %v2415
      %v2417 = vpop.f32.mrb[0].mxu0
      %v2418 = vadd.f32 %v2297, %v2417
      %v2419 = vpop.f32.mrb[0].mxu0
      %v2420 = vadd.f32 %v2299, %v2419
      %2421 = vmatprep.mubr.bf16.mxu0 0
      %2422 = vmatmul.mubr.bf16.gmra.mrb[0].mxu0 %v2371
      %v2423 = vpop.f32.mrb[0].mxu0
      %v2424 = vadd.f32 %v2303, %v2423
      %v2425 = vpop.f32.mrb[0].mxu0
      %v2426 = vadd.f32 %v2305, %v2425
      %v2427 = vpop.f32.mrb[0].mxu0
      %v2428 = vadd.f32 %v2307, %v2427
      %v2429 = vpop.f32.mrb[0].mxu0
      %v2430 = vadd.f32 %v2309, %v2429
      %2431 = vmatprep.mubr.bf16.mxu0 0
      %2432 = vmatmul.mubr.bf16.gmra.mrb[0].mxu0 %v2374
      %v2433 = vpop.f32.mrb[0].mxu0
      %v2434 = vadd.f32 %v2313, %v2433
      %v2435 = vpop.f32.mrb[0].mxu0
      %v2436 = vadd.f32 %v2315, %v2435
      %v2437 = vpop.f32.mrb[0].mxu0
      %v2438 = vadd.f32 %v2317, %v2437
      %v2439 = vpop.f32.mrb[0].mxu0
      %v2440 = vadd.f32 %v2319, %v2439
      %2441 = vmatprep.mubr.bf16.mxu0 0
      %2442 = vmatmul.mubr.bf16.gmra.mrb[0].mxu0 %v2377
      %v2443 = vpop.f32.mrb[0].mxu0
      %v2444 = vadd.f32 %v2323, %v2443
      %v2445 = vpop.f32.mrb[0].mxu0
      %v2446 = vadd.f32 %v2325, %v2445
      %v2447 = vpop.f32.mrb[0].mxu0
      %v2448 = vadd.f32 %v2327, %v2447
      %v2449 = vpop.f32.mrb[0].mxu0
      %v2450 = vadd.f32 %v2329, %v2449
      %2451 = vdwg.mxu0
      %v2452 = vld [vmem:[%s14] sm:$0xff]
      %v2453 = vld [vmem:[%s14 + $0x8] sm:$0xff]
      %v2454 = vld [vmem:[%s14 + $0x10] sm:$0xff]
      %v2455 = vld [vmem:[%s14 + $0x18] sm:$0xff]
      %v2456 = vld [vmem:[%s14 + $0x20] sm:$0xff]
      %v2457 = vld [vmem:[%s14 + $0x28] sm:$0xff]
      %v2458 = vld [vmem:[%s14 + $0x30] sm:$0xff]
      %v2459 = vld [vmem:[%s14 + $0x38] sm:$0xff]
      %2461 = vset.pattern.permute.xlu0 0
      %2462 = vperm.xlu0 %2461, %v2452
      %v2463 = vpop.permute.xlu0 %2462
      %2466 = vset.pattern.permute.xlu0 0
      %2467 = vperm.xlu0 %2466, %v2453
      %v2468 = vpop.permute.xlu0 %2467
      %2471 = vset.pattern.permute.xlu0 0
      %2472 = vperm.xlu0 %2471, %v2454
      %v2473 = vpop.permute.xlu0 %2472
      %2476 = vset.pattern.permute.xlu0 0
      %2477 = vperm.xlu0 %2476, %v2455
      %v2478 = vpop.permute.xlu0 %2477
      %2481 = vset.pattern.permute.xlu0 0
      %2482 = vperm.xlu0 %2481, %v2456
      %v2483 = vpop.permute.xlu0 %2482
      %2486 = vset.pattern.permute.xlu0 0
      %2487 = vperm.xlu0 %2486, %v2457
      %v2488 = vpop.permute.xlu0 %2487
      %2491 = vset.pattern.permute.xlu0 0
      %2492 = vperm.xlu0 %2491, %v2458
      %v2493 = vpop.permute.xlu0 %2492
      %2496 = vset.pattern.permute.xlu0 0
      %2497 = vperm.xlu0 %2496, %v2459
      %v2498 = vpop.permute.xlu0 %2497
      %v2500 = vadd.f32 %v2414, %v2463
      %v2501 = vadd.f32 %v2416, %v2463
      %v2502 = vadd.f32 %v2418, %v2468
      %v2503 = vadd.f32 %v2420, %v2468
      %v2504 = vadd.f32 %v2424, %v2473
      %v2505 = vadd.f32 %v2426, %v2473
      %v2506 = vadd.f32 %v2428, %v2478
      %v2507 = vadd.f32 %v2430, %v2478
      %v2508 = vadd.f32 %v2434, %v2483
      %v2509 = vadd.f32 %v2436, %v2483
      %v2510 = vadd.f32 %v2438, %v2488
      %v2511 = vadd.f32 %v2440, %v2488
      %v2512 = vadd.f32 %v2444, %v2493
      %v2513 = vadd.f32 %v2446, %v2493
      %v2514 = vadd.f32 %v2448, %v2498
      %v2515 = vadd.f32 %v2450, %v2498
      %vm2516 = vcmp.ge.f32.partialorder %v2500, 0.0
      %vm2517 = vcmp.ge.f32.partialorder %v2501, 0.0
      %vm2518 = vcmp.ge.f32.partialorder %v2502, 0.0
      %vm2519 = vcmp.ge.f32.partialorder %v2503, 0.0
      %vm2520 = vcmp.ge.f32.partialorder %v2504, 0.0
      %vm2521 = vcmp.ge.f32.partialorder %v2505, 0.0
      %vm2522 = vcmp.ge.f32.partialorder %v2506, 0.0
      %vm2523 = vcmp.ge.f32.partialorder %v2507, 0.0
      %vm2524 = vcmp.ge.f32.partialorder %v2508, 0.0
      %vm2525 = vcmp.ge.f32.partialorder %v2509, 0.0
      %vm2526 = vcmp.ge.f32.partialorder %v2510, 0.0
      %vm2527 = vcmp.ge.f32.partialorder %v2511, 0.0
      %vm2528 = vcmp.ge.f32.partialorder %v2512, 0.0
      %vm2529 = vcmp.ge.f32.partialorder %v2513, 0.0
      %vm2530 = vcmp.ge.f32.partialorder %v2514, 0.0
      %vm2531 = vcmp.ge.f32.partialorder %v2515, 0.0
      %v2532 = vmul.f32 %v2500, 0.2
      %v2533 = vmul.f32 %v2501, 0.2
      %v2534 = vmul.f32 %v2502, 0.2
      %v2535 = vmul.f32 %v2503, 0.2
      %v2536 = vmul.f32 %v2504, 0.2
      %v2537 = vmul.f32 %v2505, 0.2
      %v2538 = vmul.f32 %v2506, 0.2
      %v2539 = vmul.f32 %v2507, 0.2
      %v2540 = vmul.f32 %v2508, 0.2
      %v2541 = vmul.f32 %v2509, 0.2
      %v2542 = vmul.f32 %v2510, 0.2
      %v2543 = vmul.f32 %v2511, 0.2
      %v2544 = vmul.f32 %v2512, 0.2
      %v2545 = vmul.f32 %v2513, 0.2
      %v2546 = vmul.f32 %v2514, 0.2
      %v2547 = vmul.f32 %v2515, 0.2
      %v2548 = vsel %vm2516, %v2500, %v2532
      %v2549 = vsel %vm2517, %v2501, %v2533
      %v2550 = vsel %vm2518, %v2502, %v2534
      %v2551 = vsel %vm2519, %v2503, %v2535
      %v2552 = vsel %vm2520, %v2504, %v2536
      %v2553 = vsel %vm2521, %v2505, %v2537
      %v2554 = vsel %vm2522, %v2506, %v2538
      %v2555 = vsel %vm2523, %v2507, %v2539
      %v2556 = vsel %vm2524, %v2508, %v2540
      %v2557 = vsel %vm2525, %v2509, %v2541
      %v2558 = vsel %vm2526, %v2510, %v2542
      %v2559 = vsel %vm2527, %v2511, %v2543
      %v2560 = vsel %vm2528, %v2512, %v2544
      %v2561 = vsel %vm2529, %v2513, %v2545
      %v2562 = vsel %vm2530, %v2514, %v2546
      %v2563 = vsel %vm2531, %v2515, %v2547
      %2564 = vst [vmem:[%s608] sm:$0xff] %v2548
      %2565 = vst [vmem:[%s608 + $0x8] sm:$0xff] %v2549
      %2566 = vst [vmem:[%s608 + $0x10] sm:$0xff] %v2550
      %2567 = vst [vmem:[%s608 + $0x18] sm:$0xff] %v2551
      %2568 = vst [vmem:[%s608 + $0x20] sm:$0xff] %v2552
      %2569 = vst [vmem:[%s608 + $0x28] sm:$0xff] %v2553
      %2570 = vst [vmem:[%s608 + $0x30] sm:$0xff] %v2554
      %2571 = vst [vmem:[%s608 + $0x38] sm:$0xff] %v2555
      %2572 = vst [vmem:[%s608 + $0x40] sm:$0xff] %v2556
      %2573 = vst [vmem:[%s608 + $0x48] sm:$0xff] %v2557
      %2574 = vst [vmem:[%s608 + $0x50] sm:$0xff] %v2558
      %2575 = vst [vmem:[%s608 + $0x58] sm:$0xff] %v2559
      %2576 = vst [vmem:[%s608 + $0x60] sm:$0xff] %v2560
      %2577 = vst [vmem:[%s608 + $0x68] sm:$0xff] %v2561
      %2578 = vst [vmem:[%s608 + $0x70] sm:$0xff] %v2562
      %2579 = vst [vmem:[%s608 + $0x78] sm:$0xff] %v2563
      %v2580 = vld [vmem:[%s15] sm:$0x1]
      %v2581 = vpack.c.bf16 %v2550, %v2548
      %v2582 = vpack.c.bf16 %v2551, %v2549
      %v2583 = vpack.c.bf16 %v2554, %v2552
      %v2584 = vpack.c.bf16 %v2555, %v2553
      %v2585 = vpack.c.bf16 %v2558, %v2556
      %v2586 = vpack.c.bf16 %v2559, %v2557
      %v2587 = vpack.c.bf16 %v2562, %v2560
      %v2588 = vpack.c.bf16 %v2563, %v2561
      %v2589 = vld [vmem:[%s16] sm:$0x3]
      %2591 = vset.pattern.permute.xlu0 0
      %2592 = vperm.xlu0 %2591, %v2589
      %v2593 = vpop.permute.xlu0 %2592
      %v2596 = vsel %vm734, %v2580, 0
      %2598 = vmatprep.subr.bf16.mxu0 %v2582
      %2599 = vmatpush1.bf16.msra.mxu0 %v2581
      %2600 = vmatprep.subr.bf16.mxu0 %v2584
      %2601 = vmatpush1.bf16.msra.mxu0 %v2583
      %2602 = vmatprep.subr.bf16.mxu0 %v2586
      %2603 = vmatpush1.bf16.msra.mxu0 %v2585
      %2604 = vmatprep.subr.bf16.mxu0 %v2588
      %2605 = vmatpush1.bf16.msra.mxu0 %v2587
      %2606 = vmatprep.subr.bf16.mxu0 0
      %2607 = vmatpush1.bf16.msra.mxu0 0
      %2608 = vmatprep.subr.bf16.mxu0 0
      %2609 = vmatpush1.bf16.msra.mxu0 0
      %2610 = vmatprep.subr.bf16.mxu0 0
      %2611 = vmatpush1.bf16.msra.mxu0 0
      %2612 = vmatprep.subr.bf16.mxu0 0
      %2613 = vmatpush1.bf16.msra.mxu0 0
      %2614 = vmatprep.subr.bf16.mxu0 0
      %2615 = vmatpush1.bf16.msra.mxu0 0
      %2616 = vmatprep.subr.bf16.mxu0 0
      %2617 = vmatpush1.bf16.msra.mxu0 0
      %2618 = vmatprep.subr.bf16.mxu0 0
      %2619 = vmatpush1.bf16.msra.mxu0 0
      %2620 = vmatprep.subr.bf16.mxu0 0
      %2621 = vmatpush1.bf16.msra.mxu0 0
      %2622 = vmatprep.subr.bf16.mxu0 0
      %2623 = vmatpush1.bf16.msra.mxu0 0
      %2624 = vmatprep.subr.bf16.mxu0 0
      %2625 = vmatpush1.bf16.msra.mxu0 0
      %2626 = vmatprep.subr.bf16.mxu0 0
      %2627 = vmatpush1.bf16.msra.mxu0 0
      %2628 = vmatprep.subr.bf16.mxu0 0
      %2629 = vmatpush1.bf16.msra.mxu0 0
      %2630 = vmatprep.mubr.bf16.mxu0 0
      %2631 = vmatmul.mubr.bf16.gmra.mrb[0].mxu0 %v2596
      %v2632 = vpop.f32.mrb[0].mxu0
      %v2633 = vadd.f32 %v2593, %v2632
      %v2634 = vpop.f32.mrb[0].mxu0
      %v2635 = vadd.f32 %v2593, %v2634
      %v2636 = vpop.f32.mrb[0].mxu0
      %v2637 = vpop.f32.mrb[0].mxu0
      %2638 = vdwg.mxu0
      %v2641 = vcombine.low %v2633, %v2635
      %v2643 = vunpack.c.l.s4 1983009808
      %v2644 = vunpack.c.0.s8 %v2643
      %v2645 = vlaneseq
      %v2646 = vshrl.u32 %v2645, 7
      %v2647 = vsub.s32 %v2644, %v2646
      %v2648 = vrot.slane %v2641, %v2647
      %2650 = vst [vmem:[%s603] sm:$0xf] %v2648
      %p2651 = scmp.lt.s32.totalorder %s30, 1
      %s2652 = scalar_select %p2651, %s30, 1
      %s2653 = smul.addr %s2652, 2
      %s2654 = smul.addr %s2653, 2
      %s2655 = scalar_lea.vmem %s17, %s2654
      %p2656 = scmp.lt.s32.totalorder %s30, 1
      %s2657 = scalar_select %p2656, %s30, 1
      %s2658 = smul.addr %s2657, 16
      %s2659 = smul.addr %s2658, 8
      %s2660 = scalar_lea.vmem %s18, %s2659
      // Predicated region
      $region89: #{seg_module_forward.1} parent=87 // pred_check
        %p2661 = pneg %p415
      $region90: #{seg_module_forward.1} parent=87 // pred_check_branch
        %2663 = sbr.rel (%p2661) target = $region92
      $region91: #{seg_module_forward.1} parent=87 // pred_region
        _
      $region92: #{seg_module_forward.1} parent=87 // pred_fallthru
        _
      // Predicated region
      $region93: #{seg_module_forward.1} parent=87 // pred_check
        %p2664 = pneg %p441
      $region94: #{seg_module_forward.1} parent=87 // pred_check_branch
        %2666 = sbr.rel (%p2664) target = $region96
      $region95: #{seg_module_forward.1} parent=87 // pred_region
        _
      $region96: #{seg_module_forward.1} parent=87 // pred_fallthru
        _
    $region88: #{seg_module_forward.1} parent=5 // pred_fallthru
      _
    %p2667 = scmp.le.s32.totalorder 2, %s25
    // Predicated region
    $region97: #{seg_module_forward.1} parent=5 // pred_check
      %p2668 = pneg %p2667
    $region98: #{seg_module_forward.1} parent=5 // pred_check_branch
      %2670 = sbr.rel (%p2668) target = $region100
    $region99: #{seg_module_forward.1} parent=5 // pred_region
      %s2671 = ssub.s32 %s25, 2
      // Predicated region
      $region101: #{seg_module_forward.1} parent=99 // pred_check
        %p2672 = pneg %p421
      $region102: #{seg_module_forward.1} parent=99 // pred_check_branch
        %2674 = sbr.rel (%p2672) target = $region104
      $region103: #{seg_module_forward.1} parent=99 // pred_region
        %p2675 = scmp.lt.s32.totalorder %s31, 1
        %s2676 = scalar_select %p2675, %s31, 1
        %s2677 = smul.addr %s2676, 2
        %s2678 = smul.addr %s2677, 2
        %s2679 = scalar_lea.vmem %s17, %s2678
      $region104: #{seg_module_forward.1} parent=99 // pred_fallthru
        _
      // Predicated region
      $region105: #{seg_module_forward.1} parent=99 // pred_check
        %p2680 = pneg %p447
      $region106: #{seg_module_forward.1} parent=99 // pred_check_branch
        %2682 = sbr.rel (%p2680) target = $region108
      $region107: #{seg_module_forward.1} parent=99 // pred_region
        %p2683 = scmp.lt.s32.totalorder %s31, 1
        %s2684 = scalar_select %p2683, %s31, 1
        %s2685 = smul.addr %s2684, 16
        %s2686 = smul.addr %s2685, 8
        %s2687 = scalar_lea.vmem %s18, %s2686
      $region108: #{seg_module_forward.1} parent=99 // pred_fallthru
        _
    $region100: #{seg_module_forward.1} parent=5 // pred_fallthru
      _
  $region6: #{seg_module_forward.1} parent=0 // loop_footer
    %s29 = sadd.s32 1, %s25
  $region7: #{seg_module_forward.1} parent=0 // loop_footer_branch
    %24 = sbr.rel target = $region3
  $region8: #{seg_module_forward.1} parent=0 // loop_exit
    _

</llo_original>
